<compile_context>
chip_gen: v7x
topology: tpu7x:2x2x1
jax: 0.10.0
libtpu: 0.0.40
codegen_flags: <defaults>
</compile_context>

<pallas_src>
import functools

import jax
import jax.numpy as jnp
from jax.experimental import pallas as pl
from jax.experimental.pallas import tpu as pltpu


def _round_up(a, b):
    return ((a + b - 1) // b) * b


def _pick_vmem_limit():
    # v5e/v6e: 128 MiB physical VMEM -> allow up to 96 MiB scoped.
    # v7x:      64 MiB physical VMEM -> cap at ~48 MiB (leave spill headroom).
    try:
        cap = pltpu.get_tpu_info().vmem_capacity_bytes
        return min(96 * 1024 * 1024, (int(cap) * 3) // 4)
    except Exception:
        return 48 * 1024 * 1024


def _pick_tm(M, desired=None):
    # Bigger TM amortizes the ~0.35us per-grid-step cost (measured: 128-row
    # tiles ~29% of HBM roofline, 512-row ~85%).  VMEM budget: the feat tile is
    # lane-padded to 128 lanes -> TM*K*128*2 B per buffer (x2 double-buffered)
    # plus [TM*K, 128] hidden/output temporaries, so keep TM <= 256 on v7x
    # (64 MiB VMEM per TensorCore) and up to 512 on v5e/v6e (128 MiB).
    if desired is None:
        try:
            cap = pltpu.get_tpu_info().vmem_capacity_bytes
            desired = 256 if int(cap) <= 64 * 1024 * 1024 else 512
        except Exception:
            desired = 256
    tm = min(desired, _round_up(M, 16))
    # Keep at least 2 grid steps when possible so both v7x TensorCores get work.
    while tm >= 32 and _round_up(M, tm) // tm < 2:
        tm //= 2
    return tm


# ----------------------------------------------------------------------------
# Pallas kernel: per-edge 2-layer MLP + max over the K neighbors of each center
# ----------------------------------------------------------------------------
def _sa_kernel(feat_ref, w1_ref, b1_ref, w2_ref, b2_ref, out_ref, *, TM, K):
    D_pad = feat_ref.shape[-1]

    feat = feat_ref[...]                                           # [TM*K, D_pad] bf16
    # 0/1 edge-validity mask lives in the last feature column (W1's row there
    # is zero, so it never leaks into the hidden activations).
    mask = feat[:, D_pad - 1:D_pad].astype(jnp.float32)            # [TM*K, 1]

    h = jnp.dot(feat, w1_ref[...], preferred_element_type=jnp.float32) + b1_ref[...]
    h = jnp.maximum(h, 0.0).astype(jnp.bfloat16)                   # f32 ReLU, bf16 MXU in
    y = jnp.dot(h, w2_ref[...], preferred_element_type=jnp.float32) + b2_ref[...]

    # ReLU then multiplicative mask: y >= 0 and every real center has a valid
    # self-neighbor, so zeros from masked / padded edges never win the max;
    # rows of padded centers come out as exactly 0.
    y = jnp.maximum(y, 0.0) * mask                                 # [TM*K, D_out] f32

    out_ref[...] = jnp.max(
        y.reshape(TM, K, y.shape[-1]), axis=1
    ).astype(out_ref.dtype)                                        # [TM, D_out] bf16


def pointnet_conv_pallas(feat2d, w1, b1, w2, b2, *, TM, K,
                         vmem_limit_bytes=None, out_dtype=jnp.bfloat16):
    MK, D_pad = feat2d.shape
    assert MK % (TM * K) == 0
    M_pad = MK // K
    H = w1.shape[1]
    D_out = w2.shape[1]
    assert w1.shape[0] == D_pad and w2.shape[0] == H

    # Correctness guard for the mask-in-last-feature-column trick: W1's last
    # row must be exactly zero (checked only when the weights are concrete).
    try:
        mask_row_ok = bool(jnp.all(w1[D_pad - 1, :] == 0))
    except Exception:          # tracer under jit -> caller's responsibility
        mask_row_ok = True
    if not mask_row_ok:
        raise ValueError("pointnet_conv_pallas: W1 row for the mask column "
                         "(index D_pad-1) must be all zeros")

    if vmem_limit_bytes is None:
        vmem_limit_bytes = _pick_vmem_limit()

    kernel = functools.partial(_sa_kernel, TM=TM, K=K)
    return pl.pallas_call(
        kernel,
        out_shape=jax.ShapeDtypeStruct((M_pad, D_out), out_dtype),
        grid_spec=pltpu.PrefetchScalarGridSpec(
            num_scalar_prefetch=0,
            grid=(M_pad // TM,),                                   # single parallel axis
            in_specs=[
                # One contiguous [TM*K, D_pad] slab of edge features per step.
                pl.BlockSpec((TM * K, D_pad), lambda i: (i, 0)),
                pl.BlockSpec((D_pad, H), lambda i: (0, 0)),        # W1 (bf16)
                pl.BlockSpec((1, H), lambda i: (0, 0)),            # b1 (f32)
                pl.BlockSpec((H, D_out), lambda i: (0, 0)),        # W2 (bf16)
                pl.BlockSpec((1, D_out), lambda i: (0, 0)),        # b2 (f32)
            ],
            out_specs=pl.BlockSpec((TM, D_out), lambda i: (i, 0)),
        ),
        compiler_params=pltpu.CompilerParams(
            dimension_semantics=("parallel",),
            vmem_limit_bytes=vmem_limit_bytes,
        ),
    )(feat2d, w1, b1, w2, b2)


# ----------------------------------------------------------------------------
# Plain-JAX glue: farthest point sampling + radius neighbor search + gather
# ----------------------------------------------------------------------------
def _fps_single(pos_b, m):
    # Deterministic FPS starting from point 0 of each batch segment.
    # (torch_geometric's fps uses a random start; FPS output is
    # implementation-dependent there anyway.)
    nb = pos_b.shape[0]

    def step(carry, _):
        min_d, last = carry
        d = jnp.sum((pos_b - pos_b[last]) ** 2, axis=-1)
        min_d = jnp.minimum(min_d, d)
        nxt = jnp.argmax(min_d).astype(jnp.int32)
        return (min_d, nxt), last

    init = (jnp.full((nb,), jnp.inf, dtype=jnp.float32), jnp.int32(0))
    (_, _), idxs = jax.lax.scan(step, init, None, length=m)
    return idxs


def _radius(pos, batch, pos_c, batch_c, r, K):
    # Dense radius search: for each sampled center, up to K same-batch points
    # within radius r (mask-padded to exactly K columns).  top_k(valid) puts
    # valid columns first without a full O(N log N) argsort per row.
    N = pos.shape[0]
    d2 = jnp.sum((pos_c[:, None, :] - pos[None, :, :]) ** 2, axis=-1)   # [M, N]
    valid = (d2 <= r * r) & (batch_c[:, None] == batch[None, :])
    keff = min(K, N)
    score, nbr_idx = jax.lax.top_k(valid.astype(jnp.float32), keff)
    nbr_mask = score > 0.5
    if keff < K:                                                        # pad when N < K
        nbr_idx = jnp.pad(nbr_idx, ((0, 0), (0, K - keff)))
        nbr_mask = jnp.pad(nbr_mask, ((0, 0), (0, K - keff)))
    return nbr_idx.astype(jnp.int32), nbr_mask


def sa_module_forward(x, pos, batch, params, *, ratio, r, B, Nb, K, TM):
    w1, b1, w2, b2 = params
    D_pad = w1.shape[0]
    D_in = x.shape[1] + 3
    assert D_in + 1 <= D_pad

    # 1) fps  (m = int(ratio*Nb); may differ by one vs torch_geometric's count)
    m = int(ratio * Nb)
    pos_b = pos.reshape(B, Nb, 3)
    idx_local = jax.vmap(functools.partial(_fps_single, m=m))(pos_b)    # [B, m]
    idx = (idx_local + (jnp.arange(B, dtype=jnp.int32) * Nb)[:, None]).reshape(-1)
    M = idx.shape[0]

    # 2) radius neighbours (max_num_neighbors = K)
    pos_c, batch_c = pos[idx], batch[idx]
    nbr_idx, nbr_mask = _radius(pos, batch, pos_c, batch_c, r, K)

    # 3) edge features [x_j, pos_j - pos_i, 0-fill, mask], built directly in
    #    bf16 so XLA never materializes an extra f32 [M, K, D_pad] copy.  The
    #    mask sits in the last (zero-weight-row) feature column.
    # TODO(synk): move this gather into the kernel (scalar-prefetch nbr_idx,
    # keep x/pos in HBM with memory_space=pl.ANY and DMA neighbor rows per
    # center tile) to remove the HBM round-trip of `feat` entirely.
    x_j = x[nbr_idx].astype(jnp.bfloat16)                               # [M, K, C]
    rel = (pos[nbr_idx] - pos_c[:, None, :]).astype(jnp.bfloat16)       # [M, K, 3]
    parts = [x_j, rel]
    fill = D_pad - D_in - 1
    if fill > 0:
        parts.append(jnp.zeros((M, K, fill), dtype=jnp.bfloat16))
    parts.append(nbr_mask[..., None].astype(jnp.bfloat16))
    feat = jnp.concatenate(parts, axis=-1)                              # [M, K, D_pad]

    # Pad center count to a multiple of TM and flatten to 2D (the kernel does
    # no input reshape); padded rows have mask == 0 -> output rows == 0.
    M_pad = _round_up(M, TM)
    feat = jnp.pad(feat, ((0, M_pad - M), (0, 0), (0, 0)))
    feat2d = feat.reshape(M_pad * K, D_pad)

    # 4) PointNetConv (edge MLP + max aggregation) on TPU via Pallas
    x_out = pointnet_conv_pallas(feat2d, w1, b1, w2, b2, TM=TM, K=K)    # [M_pad, D_out_pad]

    return x_out, pos_c, batch_c, (feat2d, M)


def _reference(feat2d, w1, b1, w2, b2, M_pad, K):
    # Same math as the kernel, in plain JAX (f32 result).
    D_pad = feat2d.shape[-1]
    mask = feat2d[:, D_pad - 1:D_pad].astype(jnp.float32)
    h = jnp.maximum(jnp.dot(feat2d, w1, preferred_element_type=jnp.float32) + b1, 0.0)
    h = h.astype(jnp.bfloat16)
    y = jnp.maximum(jnp.dot(h, w2, preferred_element_type=jnp.float32) + b2, 0.0) * mask
    return jnp.max(y.reshape(M_pad, K, -1), axis=1)


# ----------------------------------------------------------------------------
if __name__ == "__main__":
    key = jax.random.PRNGKey(0)
    k1, k2, k3, k4, k5, k6 = jax.random.split(key, 6)

    # small deterministic problem
    B, Nb, C = 2, 16, 4            # 2 batches, 16 points each, 4 feature channels
    N = B * Nb
    ratio, r = 0.5, 0.75           # SAModule(ratio=0.5, r=0.75, nn=MLP([C+3, 32, 32]))
    K = 64                         # max_num_neighbors (mask-padded)
    H_true, D_out_true = 32, 32    # true hidden / output width of `nn`
    H, D_out = 128, 128            # lane-dense padded widths (zero padding, inert thru ReLU)
    D_in = C + 3                   # 7
    D_pad = 8                      # D_in + 1 mask column, sublane-friendly

    M = B * int(ratio * Nb)        # number of sampled centers (16)
    TM = _pick_tm(M)               # 256-512 for real workloads, clamped for tiny demo

    pos = jax.random.uniform(k1, (N, 3), dtype=jnp.float32)
    x = jax.random.normal(k2, (N, C), dtype=jnp.float32)
    batch = jnp.repeat(jnp.arange(B, dtype=jnp.int32), Nb)

    # deterministic `nn` parameters (2-layer MLP with ReLU), zero-padded to
    # (D_pad, H) / (H, D_out); mask row of W1 and all pad rows/cols are zero.
    # NOTE: the bf16 cast of the hidden activation (and weights) is an
    # intentional deviation from the f32 PyTorch MLP; tolerance ~bf16 epsilon.
    w1_t = jax.random.normal(k3, (D_in, H_true), dtype=jnp.float32) * 0.1
    w1 = jnp.zeros((D_pad, H), jnp.float32).at[:D_in, :H_true].set(w1_t).astype(jnp.bfloat16)
    b1 = jnp.zeros((1, H), jnp.float32).at[:, :H_true].set(
        jax.random.normal(k4, (1, H_true), dtype=jnp.float32) * 0.1)
    w2_t = jax.random.normal(k5, (H_true, D_out_true), dtype=jnp.float32) * 0.1
    w2 = jnp.zeros((H, D_out), jnp.float32).at[:H_true, :D_out_true].set(w2_t).astype(jnp.bfloat16)
    b2 = jnp.zeros((1, D_out), jnp.float32).at[:, :D_out_true].set(
        jax.random.normal(k6, (1, D_out_true), dtype=jnp.float32) * 0.1)
    params = (w1, b1, w2, b2)

    x_out_full, pos_out, batch_out, (feat2d, M_real) = sa_module_forward(
        x, pos, batch, params, ratio=ratio, r=r, B=B, Nb=Nb, K=K, TM=TM
    )
    x_out_full = jax.block_until_ready(x_out_full)
    x_out = x_out_full[:M_real, :D_out_true].astype(jnp.float32)

    M_pad = x_out_full.shape[0]
    ref = _reference(feat2d, w1, b1, w2, b2, M_pad, K)[:M_real, :D_out_true]
    assert x_out.shape == (M_real, D_out_true)
    assert pos_out.shape == (M_real, 3) and batch_out.shape == (M_real,)
    # kernel output is bf16 -> compare at bf16 precision
    assert jnp.allclose(x_out, ref, atol=2e-2, rtol=2e-2), "kernel mismatch vs JAX reference"
    # padded-center rows are exactly zero (multiplicative mask, no sentinel)
    assert bool(jnp.all(x_out_full[M_real:] == 0))

    print("KERNEL_OK")
</pallas_src>

<mosaic_0001>
module attributes {stable_mosaic.version = 11 : i64} {
  func.func @_sa_kernel(%arg0: i32, %arg1: memref<1024x8xbf16, #tpu.memory_space<vmem>>, %arg2: memref<8x128xbf16, #tpu.memory_space<vmem>>, %arg3: memref<1x128xf32, #tpu.memory_space<vmem>>, %arg4: memref<128x128xbf16, #tpu.memory_space<vmem>>, %arg5: memref<1x128xf32, #tpu.memory_space<vmem>>, %arg6: memref<16x128xbf16, #tpu.memory_space<vmem>>) attributes {dimension_semantics = [#tpu.dimension_semantics<parallel>], iteration_bounds = array<i64: 1>, scalar_prefetch = 0 : i64, scratch_operands = 0 : i64, tpu.core_type = #tpu.core_type<tc>, window_params = [{transform_indices = @transform_0, window_bounds = array<i64: 1024, 8>}, {pipeline_mode = #tpu.pipeline_mode<synchronous>, transform_indices = @transform_1, window_bounds = array<i64: 8, 128>}, {pipeline_mode = #tpu.pipeline_mode<synchronous>, transform_indices = @transform_2, window_bounds = array<i64: 1, 128>}, {pipeline_mode = #tpu.pipeline_mode<synchronous>, transform_indices = @transform_3, window_bounds = array<i64: 128, 128>}, {pipeline_mode = #tpu.pipeline_mode<synchronous>, transform_indices = @transform_4, window_bounds = array<i64: 1, 128>}, {transform_indices = @transform_5, window_bounds = array<i64: 16, 128>}]} {
    %c0 = arith.constant 0 : index
    %c0_0 = arith.constant 0 : index
    %0 = vector.load %arg1[%c0, %c0_0] : memref<1024x8xbf16, #tpu.memory_space<vmem>>, vector<1024x8xbf16>
    %1 = vector.extract_strided_slice %0 {offsets = [0, 7], sizes = [1024, 1], strides = [1, 1]} : vector<1024x8xbf16> to vector<1024x1xbf16>
    %2 = arith.extf %1 : vector<1024x1xbf16> to vector<1024x1xf32>
    %c0_1 = arith.constant 0 : index
    %c0_2 = arith.constant 0 : index
    %3 = vector.load %arg2[%c0_1, %c0_2] : memref<8x128xbf16, #tpu.memory_space<vmem>>, vector<8x128xbf16>
    %cst = arith.constant dense<0.000000e+00> : vector<1024x128xf32>
    %4 = tpu.matmul %0, %3, %cst {dimension_numbers = #tpu.dot_dimension_numbers<[1], [0], [0], [1], [0, 0, 1, 1], [], []>} : vector<1024x8xbf16>, vector<8x128xbf16>, vector<1024x128xf32> -> vector<1024x128xf32>
    %c0_3 = arith.constant 0 : index
    %c0_4 = arith.constant 0 : index
    %5 = vector.load %arg3[%c0_3, %c0_4] : memref<1x128xf32, #tpu.memory_space<vmem>>, vector<1x128xf32>
    %6 = vector.broadcast %5 : vector<1x128xf32> to vector<1024x128xf32>
    %7 = arith.addf %4, %6 : vector<1024x128xf32>
    %cst_5 = arith.constant 0.000000e+00 : f32
    %8 = vector.broadcast %cst_5 : f32 to vector<1024x128xf32>
    %9 = arith.maximumf %7, %8 : vector<1024x128xf32>
    %10 = arith.truncf %9 : vector<1024x128xf32> to vector<1024x128xbf16>
    %c0_6 = arith.constant 0 : index
    %c0_7 = arith.constant 0 : index
    %11 = vector.load %arg4[%c0_6, %c0_7] : memref<128x128xbf16, #tpu.memory_space<vmem>>, vector<128x128xbf16>
    %cst_8 = arith.constant dense<0.000000e+00> : vector<1024x128xf32>
    %12 = tpu.matmul %10, %11, %cst_8 {dimension_numbers = #tpu.dot_dimension_numbers<[1], [0], [0], [1], [0, 0, 1, 1], [], []>} : vector<1024x128xbf16>, vector<128x128xbf16>, vector<1024x128xf32> -> vector<1024x128xf32>
    %c0_9 = arith.constant 0 : index
    %c0_10 = arith.constant 0 : index
    %13 = vector.load %arg5[%c0_9, %c0_10] : memref<1x128xf32, #tpu.memory_space<vmem>>, vector<1x128xf32>
    %14 = vector.broadcast %13 : vector<1x128xf32> to vector<1024x128xf32>
    %15 = arith.addf %12, %14 : vector<1024x128xf32>
    %cst_11 = arith.constant 0.000000e+00 : f32
    %16 = vector.broadcast %cst_11 : f32 to vector<1024x128xf32>
    %17 = arith.maximumf %15, %16 : vector<1024x128xf32>
    %18 = vector.broadcast %2 : vector<1024x1xf32> to vector<1024x128xf32>
    %19 = arith.mulf %17, %18 : vector<1024x128xf32>
    %20 = vector.shape_cast %19 : vector<1024x128xf32> to vector<16x64x128xf32>
    %cst_12 = arith.constant dense<0xFF800000> : vector<16x128xf32>
    %21 = vector.multi_reduction <maximumf>, %20, %cst_12 [1] : vector<16x64x128xf32> to vector<16x128xf32>
    %22 = arith.truncf %21 : vector<16x128xf32> to vector<16x128xbf16>
    %c0_13 = arith.constant 0 : index
    %c0_14 = arith.constant 0 : index
    %23 = vector.load %arg6[%c0_13, %c0_14] : memref<16x128xbf16, #tpu.memory_space<vmem>>, vector<16x128xbf16>
    tpu.vector_store %arg6[%c0_13, %c0_14], %22 {strides = array<i32>} : memref<16x128xbf16, #tpu.memory_space<vmem>>, vector<16x128xbf16>,
    return
  }
  func.func @transform_0(%arg0: i32) -> (i32, i32) {
    %c0_i32 = arith.constant 0 : i32
    %c0_i32_0 = arith.constant 0 : i32
    return %arg0, %c0_i32 : i32, i32
  }
  func.func @transform_1(%arg0: i32) -> (i32, i32) {
    %c0_i32 = arith.constant 0 : i32
    %c0_i32_0 = arith.constant 0 : i32
    %c0_i32_1 = arith.constant 0 : i32
    return %c0_i32, %c0_i32_0 : i32, i32
  }
  func.func @transform_2(%arg0: i32) -> (i32, i32) {
    %c0_i32 = arith.constant 0 : i32
    %c0_i32_0 = arith.constant 0 : i32
    %c0_i32_1 = arith.constant 0 : i32
    return %c0_i32, %c0_i32_0 : i32, i32
  }
  func.func @transform_3(%arg0: i32) -> (i32, i32) {
    %c0_i32 = arith.constant 0 : i32
    %c0_i32_0 = arith.constant 0 : i32
    %c0_i32_1 = arith.constant 0 : i32
    return %c0_i32, %c0_i32_0 : i32, i32
  }
  func.func @transform_4(%arg0: i32) -> (i32, i32) {
    %c0_i32 = arith.constant 0 : i32
    %c0_i32_0 = arith.constant 0 : i32
    %c0_i32_1 = arith.constant 0 : i32
    return %c0_i32, %c0_i32_0 : i32, i32
  }
  func.func @transform_5(%arg0: i32) -> (i32, i32) {
    %c0_i32 = arith.constant 0 : i32
    %c0_i32_0 = arith.constant 0 : i32
    return %arg0, %c0_i32 : i32, i32
  }
}

</mosaic_0001>

<llo_original>
// kernel: tpu_custom_call.1
$region0: #{tpu_custom_call.1}
  #allocation0 [shape = 'u32[]', space=smem, size = 0x4, offset = 0x4, fixed_abs, tag = 'smem constant byte address 0x4 - core index']
  #allocation1 [shape = 'u32[144,128]{1,0:T(1,128)}', space=vmem, size = 0x12000, scoped, tag = 'internal scratch']
  %s0 = inlined_call_operand.vmem [shape: bf16[1024,8], index: 0, kind: input, shape index: {}]
  %s1 = inlined_call_operand.vmem [shape: bf16[8,128], index: 1, kind: input, shape index: {}]
  %s2 = inlined_call_operand.vmem [shape: f32[1,128], index: 2, kind: input, shape index: {}]
  %s3 = inlined_call_operand.vmem [shape: bf16[128,128], index: 3, kind: input, shape index: {}]
  %s4 = inlined_call_operand.vmem [shape: f32[1,128], index: 4, kind: input, shape index: {}]
  %s5 = inlined_call_operand.hbm [shape: bf16[16,128], index: 5, kind: output, shape index: {}]
  %s6 = sld [smem:[#allocation0]]
  $region30: #{tpu_custom_call.1} parent=0
    _
  %s8 = ssub.s32 1, %s6
  %s9 = scalar_select 0, %s8, %s6
  $region1: #{tpu_custom_call.1} parent=0
    #allocation2 [shape = 'u8[4096]{0}', space=vmem, size = 0x1000, scoped, tag = 'output window, operand 0, single buffered']
    #allocation3 [shape = 's32[1]{0}', space=sflag, size = 0x4, scoped, tag = 'scoped memory for tpu_custom_call.1']
    %10 = vsyncpa [#allocation3], 0
    // Predicated region
    $region2: #{tpu_custom_call.1} parent=1 // pred_check
      _
    $region3: #{tpu_custom_call.1} parent=1 // pred_check_branch
      %12 = sbr.rel (0) target = $region5
    $region4: #{tpu_custom_call.1} parent=1 // pred_region
      _
    $region5: #{tpu_custom_call.1} parent=1 // pred_fallthru
      _
    // Predicated region
    $region6: #{tpu_custom_call.1} parent=1 // pred_check
      _
    $region7: #{tpu_custom_call.1} parent=1 // pred_check_branch
      %14 = sbr.rel (0) target = $region9
    $region8: #{tpu_custom_call.1} parent=1 // pred_region
      _
    $region9: #{tpu_custom_call.1} parent=1 // pred_fallthru
      _
    // Predicated region
    $region10: #{tpu_custom_call.1} parent=1 // pred_check
      _
    $region11: #{tpu_custom_call.1} parent=1 // pred_check_branch
      %16 = sbr.rel (0) target = $region13
    $region12: #{tpu_custom_call.1} parent=1 // pred_region
      _
    $region13: #{tpu_custom_call.1} parent=1 // pred_fallthru
      _
    // Predicated region
    $region14: #{tpu_custom_call.1} parent=1 // pred_check
      _
    $region15: #{tpu_custom_call.1} parent=1 // pred_check_branch
      %18 = sbr.rel (0) target = $region17
    $region16: #{tpu_custom_call.1} parent=1 // pred_region
      _
    $region17: #{tpu_custom_call.1} parent=1 // pred_fallthru
      _
    // Predicated region
    $region18: #{tpu_custom_call.1} parent=1 // pred_check
      _
    $region19: #{tpu_custom_call.1} parent=1 // pred_check_branch
      %20 = sbr.rel (0) target = $region21
    $region20: #{tpu_custom_call.1} parent=1 // pred_region
      _
    $region21: #{tpu_custom_call.1} parent=1 // pred_fallthru
      _
    %v22 = vld [vmem:[%s0] sm:$0xf]
    %v23 = vld [vmem:[%s0 + $0x4] sm:$0xf]
    %v24 = vld [vmem:[%s0 + $0x8] sm:$0xf]
    %v25 = vld [vmem:[%s0 + $0xc] sm:$0xf]
    %v26 = vld [vmem:[%s0 + $0x10] sm:$0xf]
    %v27 = vld [vmem:[%s0 + $0x14] sm:$0xf]
    %v28 = vld [vmem:[%s0 + $0x18] sm:$0xf]
    %v29 = vld [vmem:[%s0 + $0x1c] sm:$0xf]
    %v30 = vld [vmem:[%s0 + $0x20] sm:$0xf]
    %v31 = vld [vmem:[%s0 + $0x24] sm:$0xf]
    %v32 = vld [vmem:[%s0 + $0x28] sm:$0xf]
    %v33 = vld [vmem:[%s0 + $0x2c] sm:$0xf]
    %v34 = vld [vmem:[%s0 + $0x30] sm:$0xf]
    %v35 = vld [vmem:[%s0 + $0x34] sm:$0xf]
    %v36 = vld [vmem:[%s0 + $0x38] sm:$0xf]
    %v37 = vld [vmem:[%s0 + $0x3c] sm:$0xf]
    %v38 = vld [vmem:[%s0 + $0x40] sm:$0xf]
    %v39 = vld [vmem:[%s0 + $0x44] sm:$0xf]
    %v40 = vld [vmem:[%s0 + $0x48] sm:$0xf]
    %v41 = vld [vmem:[%s0 + $0x4c] sm:$0xf]
    %v42 = vld [vmem:[%s0 + $0x50] sm:$0xf]
    %v43 = vld [vmem:[%s0 + $0x54] sm:$0xf]
    %v44 = vld [vmem:[%s0 + $0x58] sm:$0xf]
    %v45 = vld [vmem:[%s0 + $0x5c] sm:$0xf]
    %v46 = vld [vmem:[%s0 + $0x60] sm:$0xf]
    %v47 = vld [vmem:[%s0 + $0x64] sm:$0xf]
    %v48 = vld [vmem:[%s0 + $0x68] sm:$0xf]
    %v49 = vld [vmem:[%s0 + $0x6c] sm:$0xf]
    %v50 = vld [vmem:[%s0 + $0x70] sm:$0xf]
    %v51 = vld [vmem:[%s0 + $0x74] sm:$0xf]
    %v52 = vld [vmem:[%s0 + $0x78] sm:$0xf]
    %v53 = vld [vmem:[%s0 + $0x7c] sm:$0xf]
    %v54 = vld [vmem:[%s0 + $0x80] sm:$0xf]
    %v55 = vld [vmem:[%s0 + $0x84] sm:$0xf]
    %v56 = vld [vmem:[%s0 + $0x88] sm:$0xf]
    %v57 = vld [vmem:[%s0 + $0x8c] sm:$0xf]
    %v58 = vld [vmem:[%s0 + $0x90] sm:$0xf]
    %v59 = vld [vmem:[%s0 + $0x94] sm:$0xf]
    %v60 = vld [vmem:[%s0 + $0x98] sm:$0xf]
    %v61 = vld [vmem:[%s0 + $0x9c] sm:$0xf]
    %v62 = vld [vmem:[%s0 + $0xa0] sm:$0xf]
    %v63 = vld [vmem:[%s0 + $0xa4] sm:$0xf]
    %v64 = vld [vmem:[%s0 + $0xa8] sm:$0xf]
    %v65 = vld [vmem:[%s0 + $0xac] sm:$0xf]
    %v66 = vld [vmem:[%s0 + $0xb0] sm:$0xf]
    %v67 = vld [vmem:[%s0 + $0xb4] sm:$0xf]
    %v68 = vld [vmem:[%s0 + $0xb8] sm:$0xf]
    %v69 = vld [vmem:[%s0 + $0xbc] sm:$0xf]
    %v70 = vld [vmem:[%s0 + $0xc0] sm:$0xf]
    %v71 = vld [vmem:[%s0 + $0xc4] sm:$0xf]
    %v72 = vld [vmem:[%s0 + $0xc8] sm:$0xf]
    %v73 = vld [vmem:[%s0 + $0xcc] sm:$0xf]
    %v74 = vld [vmem:[%s0 + $0xd0] sm:$0xf]
    %v75 = vld [vmem:[%s0 + $0xd4] sm:$0xf]
    %v76 = vld [vmem:[%s0 + $0xd8] sm:$0xf]
    %v77 = vld [vmem:[%s0 + $0xdc] sm:$0xf]
    %v78 = vld [vmem:[%s0 + $0xe0] sm:$0xf]
    %v79 = vld [vmem:[%s0 + $0xe4] sm:$0xf]
    %v80 = vld [vmem:[%s0 + $0xe8] sm:$0xf]
    %v81 = vld [vmem:[%s0 + $0xec] sm:$0xf]
    %v82 = vld [vmem:[%s0 + $0xf0] sm:$0xf]
    %v83 = vld [vmem:[%s0 + $0xf4] sm:$0xf]
    %v84 = vld [vmem:[%s0 + $0xf8] sm:$0xf]
    %v85 = vld [vmem:[%s0 + $0xfc] sm:$0xf]
    %v86 = vld [vmem:[%s0 + $0x100] sm:$0xf]
    %v87 = vld [vmem:[%s0 + $0x104] sm:$0xf]
    %v88 = vld [vmem:[%s0 + $0x108] sm:$0xf]
    %v89 = vld [vmem:[%s0 + $0x10c] sm:$0xf]
    %v90 = vld [vmem:[%s0 + $0x110] sm:$0xf]
    %v91 = vld [vmem:[%s0 + $0x114] sm:$0xf]
    %v92 = vld [vmem:[%s0 + $0x118] sm:$0xf]
    %v93 = vld [vmem:[%s0 + $0x11c] sm:$0xf]
    %v94 = vld [vmem:[%s0 + $0x120] sm:$0xf]
    %v95 = vld [vmem:[%s0 + $0x124] sm:$0xf]
    %v96 = vld [vmem:[%s0 + $0x128] sm:$0xf]
    %v97 = vld [vmem:[%s0 + $0x12c] sm:$0xf]
    %v98 = vld [vmem:[%s0 + $0x130] sm:$0xf]
    %v99 = vld [vmem:[%s0 + $0x134] sm:$0xf]
    %v100 = vld [vmem:[%s0 + $0x138] sm:$0xf]
    %v101 = vld [vmem:[%s0 + $0x13c] sm:$0xf]
    %v102 = vld [vmem:[%s0 + $0x140] sm:$0xf]
    %v103 = vld [vmem:[%s0 + $0x144] sm:$0xf]
    %v104 = vld [vmem:[%s0 + $0x148] sm:$0xf]
    %v105 = vld [vmem:[%s0 + $0x14c] sm:$0xf]
    %v106 = vld [vmem:[%s0 + $0x150] sm:$0xf]
    %v107 = vld [vmem:[%s0 + $0x154] sm:$0xf]
    %v108 = vld [vmem:[%s0 + $0x158] sm:$0xf]
    %v109 = vld [vmem:[%s0 + $0x15c] sm:$0xf]
    %v110 = vld [vmem:[%s0 + $0x160] sm:$0xf]
    %v111 = vld [vmem:[%s0 + $0x164] sm:$0xf]
    %v112 = vld [vmem:[%s0 + $0x168] sm:$0xf]
    %v113 = vld [vmem:[%s0 + $0x16c] sm:$0xf]
    %v114 = vld [vmem:[%s0 + $0x170] sm:$0xf]
    %v115 = vld [vmem:[%s0 + $0x174] sm:$0xf]
    %v116 = vld [vmem:[%s0 + $0x178] sm:$0xf]
    %v117 = vld [vmem:[%s0 + $0x17c] sm:$0xf]
    %v118 = vld [vmem:[%s0 + $0x180] sm:$0xf]
    %v119 = vld [vmem:[%s0 + $0x184] sm:$0xf]
    %v120 = vld [vmem:[%s0 + $0x188] sm:$0xf]
    %v121 = vld [vmem:[%s0 + $0x18c] sm:$0xf]
    %v122 = vld [vmem:[%s0 + $0x190] sm:$0xf]
    %v123 = vld [vmem:[%s0 + $0x194] sm:$0xf]
    %v124 = vld [vmem:[%s0 + $0x198] sm:$0xf]
    %v125 = vld [vmem:[%s0 + $0x19c] sm:$0xf]
    %v126 = vld [vmem:[%s0 + $0x1a0] sm:$0xf]
    %v127 = vld [vmem:[%s0 + $0x1a4] sm:$0xf]
    %v128 = vld [vmem:[%s0 + $0x1a8] sm:$0xf]
    %v129 = vld [vmem:[%s0 + $0x1ac] sm:$0xf]
    %v130 = vld [vmem:[%s0 + $0x1b0] sm:$0xf]
    %v131 = vld [vmem:[%s0 + $0x1b4] sm:$0xf]
    %v132 = vld [vmem:[%s0 + $0x1b8] sm:$0xf]
    %v133 = vld [vmem:[%s0 + $0x1bc] sm:$0xf]
    %v134 = vld [vmem:[%s0 + $0x1c0] sm:$0xf]
    %v135 = vld [vmem:[%s0 + $0x1c4] sm:$0xf]
    %v136 = vld [vmem:[%s0 + $0x1c8] sm:$0xf]
    %v137 = vld [vmem:[%s0 + $0x1cc] sm:$0xf]
    %v138 = vld [vmem:[%s0 + $0x1d0] sm:$0xf]
    %v139 = vld [vmem:[%s0 + $0x1d4] sm:$0xf]
    %v140 = vld [vmem:[%s0 + $0x1d8] sm:$0xf]
    %v141 = vld [vmem:[%s0 + $0x1dc] sm:$0xf]
    %v142 = vld [vmem:[%s0 + $0x1e0] sm:$0xf]
    %v143 = vld [vmem:[%s0 + $0x1e4] sm:$0xf]
    %v144 = vld [vmem:[%s0 + $0x1e8] sm:$0xf]
    %v145 = vld [vmem:[%s0 + $0x1ec] sm:$0xf]
    %v146 = vld [vmem:[%s0 + $0x1f0] sm:$0xf]
    %v147 = vld [vmem:[%s0 + $0x1f4] sm:$0xf]
    %v148 = vld [vmem:[%s0 + $0x1f8] sm:$0xf]
    %v149 = vld [vmem:[%s0 + $0x1fc] sm:$0xf]
    %v150 = vunpack.c.l.bf16 %v22
    %v151 = vunpack.c.l.bf16 %v23
    %v152 = vunpack.c.l.bf16 %v24
    %v153 = vunpack.c.l.bf16 %v25
    %v154 = vunpack.c.l.bf16 %v26
    %v155 = vunpack.c.l.bf16 %v27
    %v156 = vunpack.c.l.bf16 %v28
    %v157 = vunpack.c.l.bf16 %v29
    %v158 = vunpack.c.l.bf16 %v30
    %v159 = vunpack.c.l.bf16 %v31
    %v160 = vunpack.c.l.bf16 %v32
    %v161 = vunpack.c.l.bf16 %v33
    %v162 = vunpack.c.l.bf16 %v34
    %v163 = vunpack.c.l.bf16 %v35
    %v164 = vunpack.c.l.bf16 %v36
    %v165 = vunpack.c.l.bf16 %v37
    %v166 = vunpack.c.l.bf16 %v38
    %v167 = vunpack.c.l.bf16 %v39
    %v168 = vunpack.c.l.bf16 %v40
    %v169 = vunpack.c.l.bf16 %v41
    %v170 = vunpack.c.l.bf16 %v42
    %v171 = vunpack.c.l.bf16 %v43
    %v172 = vunpack.c.l.bf16 %v44
    %v173 = vunpack.c.l.bf16 %v45
    %v174 = vunpack.c.l.bf16 %v46
    %v175 = vunpack.c.l.bf16 %v47
    %v176 = vunpack.c.l.bf16 %v48
    %v177 = vunpack.c.l.bf16 %v49
    %v178 = vunpack.c.l.bf16 %v50
    %v179 = vunpack.c.l.bf16 %v51
    %v180 = vunpack.c.l.bf16 %v52
    %v181 = vunpack.c.l.bf16 %v53
    %v182 = vunpack.c.l.bf16 %v54
    %v183 = vunpack.c.l.bf16 %v55
    %v184 = vunpack.c.l.bf16 %v56
    %v185 = vunpack.c.l.bf16 %v57
    %v186 = vunpack.c.l.bf16 %v58
    %v187 = vunpack.c.l.bf16 %v59
    %v188 = vunpack.c.l.bf16 %v60
    %v189 = vunpack.c.l.bf16 %v61
    %v190 = vunpack.c.l.bf16 %v62
    %v191 = vunpack.c.l.bf16 %v63
    %v192 = vunpack.c.l.bf16 %v64
    %v193 = vunpack.c.l.bf16 %v65
    %v194 = vunpack.c.l.bf16 %v66
    %v195 = vunpack.c.l.bf16 %v67
    %v196 = vunpack.c.l.bf16 %v68
    %v197 = vunpack.c.l.bf16 %v69
    %v198 = vunpack.c.l.bf16 %v70
    %v199 = vunpack.c.l.bf16 %v71
    %v200 = vunpack.c.l.bf16 %v72
    %v201 = vunpack.c.l.bf16 %v73
    %v202 = vunpack.c.l.bf16 %v74
    %v203 = vunpack.c.l.bf16 %v75
    %v204 = vunpack.c.l.bf16 %v76
    %v205 = vunpack.c.l.bf16 %v77
    %v206 = vunpack.c.l.bf16 %v78
    %v207 = vunpack.c.l.bf16 %v79
    %v208 = vunpack.c.l.bf16 %v80
    %v209 = vunpack.c.l.bf16 %v81
    %v210 = vunpack.c.l.bf16 %v82
    %v211 = vunpack.c.l.bf16 %v83
    %v212 = vunpack.c.l.bf16 %v84
    %v213 = vunpack.c.l.bf16 %v85
    %v214 = vunpack.c.l.bf16 %v86
    %v215 = vunpack.c.l.bf16 %v87
    %v216 = vunpack.c.l.bf16 %v88
    %v217 = vunpack.c.l.bf16 %v89
    %v218 = vunpack.c.l.bf16 %v90
    %v219 = vunpack.c.l.bf16 %v91
    %v220 = vunpack.c.l.bf16 %v92
    %v221 = vunpack.c.l.bf16 %v93
    %v222 = vunpack.c.l.bf16 %v94
    %v223 = vunpack.c.l.bf16 %v95
    %v224 = vunpack.c.l.bf16 %v96
    %v225 = vunpack.c.l.bf16 %v97
    %v226 = vunpack.c.l.bf16 %v98
    %v227 = vunpack.c.l.bf16 %v99
    %v228 = vunpack.c.l.bf16 %v100
    %v229 = vunpack.c.l.bf16 %v101
    %v230 = vunpack.c.l.bf16 %v102
    %v231 = vunpack.c.l.bf16 %v103
    %v232 = vunpack.c.l.bf16 %v104
    %v233 = vunpack.c.l.bf16 %v105
    %v234 = vunpack.c.l.bf16 %v106
    %v235 = vunpack.c.l.bf16 %v107
    %v236 = vunpack.c.l.bf16 %v108
    %v237 = vunpack.c.l.bf16 %v109
    %v238 = vunpack.c.l.bf16 %v110
    %v239 = vunpack.c.l.bf16 %v111
    %v240 = vunpack.c.l.bf16 %v112
    %v241 = vunpack.c.l.bf16 %v113
    %v242 = vunpack.c.l.bf16 %v114
    %v243 = vunpack.c.l.bf16 %v115
    %v244 = vunpack.c.l.bf16 %v116
    %v245 = vunpack.c.l.bf16 %v117
    %v246 = vunpack.c.l.bf16 %v118
    %v247 = vunpack.c.l.bf16 %v119
    %v248 = vunpack.c.l.bf16 %v120
    %v249 = vunpack.c.l.bf16 %v121
    %v250 = vunpack.c.l.bf16 %v122
    %v251 = vunpack.c.l.bf16 %v123
    %v252 = vunpack.c.l.bf16 %v124
    %v253 = vunpack.c.l.bf16 %v125
    %v254 = vunpack.c.l.bf16 %v126
    %v255 = vunpack.c.l.bf16 %v127
    %v256 = vunpack.c.l.bf16 %v128
    %v257 = vunpack.c.l.bf16 %v129
    %v258 = vunpack.c.l.bf16 %v130
    %v259 = vunpack.c.l.bf16 %v131
    %v260 = vunpack.c.l.bf16 %v132
    %v261 = vunpack.c.l.bf16 %v133
    %v262 = vunpack.c.l.bf16 %v134
    %v263 = vunpack.c.l.bf16 %v135
    %v264 = vunpack.c.l.bf16 %v136
    %v265 = vunpack.c.l.bf16 %v137
    %v266 = vunpack.c.l.bf16 %v138
    %v267 = vunpack.c.l.bf16 %v139
    %v268 = vunpack.c.l.bf16 %v140
    %v269 = vunpack.c.l.bf16 %v141
    %v270 = vunpack.c.l.bf16 %v142
    %v271 = vunpack.c.l.bf16 %v143
    %v272 = vunpack.c.l.bf16 %v144
    %v273 = vunpack.c.l.bf16 %v145
    %v274 = vunpack.c.l.bf16 %v146
    %v275 = vunpack.c.l.bf16 %v147
    %v276 = vunpack.c.l.bf16 %v148
    %v277 = vunpack.c.l.bf16 %v149
    %v278 = vld [vmem:[%s1] sm:$0xf]
    %v279 = vld [vmem:[%s2] sm:$0x1]
    %v281 = vlaneseq
    %v282 = vshrl.u32 %v281, 7
    %v283 = vsub.s32 0, %v282
    %v284 = vrot.slane %v279, %v283
    %v414 = vunpack.c.l.b16 %v22
    %v415 = vunpack.c.l.b16 %v23
    %v416 = vunpack.c.l.b16 %v24
    %v417 = vunpack.c.l.b16 %v25
    %v418 = vunpack.c.l.b16 %v26
    %v419 = vunpack.c.l.b16 %v27
    %v420 = vunpack.c.l.b16 %v28
    %v421 = vunpack.c.l.b16 %v29
    %v422 = vunpack.c.l.b16 %v30
    %v423 = vunpack.c.l.b16 %v31
    %v424 = vunpack.c.l.b16 %v32
    %v425 = vunpack.c.l.b16 %v33
    %v426 = vunpack.c.l.b16 %v34
    %v427 = vunpack.c.l.b16 %v35
    %v428 = vunpack.c.l.b16 %v36
    %v429 = vunpack.c.l.b16 %v37
    %v430 = vunpack.c.l.b16 %v38
    %v431 = vunpack.c.l.b16 %v39
    %v432 = vunpack.c.l.b16 %v40
    %v433 = vunpack.c.l.b16 %v41
    %v434 = vunpack.c.l.b16 %v42
    %v435 = vunpack.c.l.b16 %v43
    %v436 = vunpack.c.l.b16 %v44
    %v437 = vunpack.c.l.b16 %v45
    %v438 = vunpack.c.l.b16 %v46
    %v439 = vunpack.c.l.b16 %v47
    %v440 = vunpack.c.l.b16 %v48
    %v441 = vunpack.c.l.b16 %v49
    %v442 = vunpack.c.l.b16 %v50
    %v443 = vunpack.c.l.b16 %v51
    %v444 = vunpack.c.l.b16 %v52
    %v445 = vunpack.c.l.b16 %v53
    %v446 = vunpack.c.l.b16 %v54
    %v447 = vunpack.c.l.b16 %v55
    %v448 = vunpack.c.l.b16 %v56
    %v449 = vunpack.c.l.b16 %v57
    %v450 = vunpack.c.l.b16 %v58
    %v451 = vunpack.c.l.b16 %v59
    %v452 = vunpack.c.l.b16 %v60
    %v453 = vunpack.c.l.b16 %v61
    %v454 = vunpack.c.l.b16 %v62
    %v455 = vunpack.c.l.b16 %v63
    %v456 = vunpack.c.l.b16 %v64
    %v457 = vunpack.c.l.b16 %v65
    %v458 = vunpack.c.l.b16 %v66
    %v459 = vunpack.c.l.b16 %v67
    %v460 = vunpack.c.l.b16 %v68
    %v461 = vunpack.c.l.b16 %v69
    %v462 = vunpack.c.l.b16 %v70
    %v463 = vunpack.c.l.b16 %v71
    %v464 = vunpack.c.l.b16 %v72
    %v465 = vunpack.c.l.b16 %v73
    %v466 = vunpack.c.l.b16 %v74
    %v467 = vunpack.c.l.b16 %v75
    %v468 = vunpack.c.l.b16 %v76
    %v469 = vunpack.c.l.b16 %v77
    %v470 = vunpack.c.l.b16 %v78
    %v471 = vunpack.c.l.b16 %v79
    %v472 = vunpack.c.l.b16 %v80
    %v473 = vunpack.c.l.b16 %v81
    %v474 = vunpack.c.l.b16 %v82
    %v475 = vunpack.c.l.b16 %v83
    %v476 = vunpack.c.l.b16 %v84
    %v477 = vunpack.c.l.b16 %v85
    %v478 = vunpack.c.l.b16 %v86
    %v479 = vunpack.c.l.b16 %v87
    %v480 = vunpack.c.l.b16 %v88
    %v481 = vunpack.c.l.b16 %v89
    %v482 = vunpack.c.l.b16 %v90
    %v483 = vunpack.c.l.b16 %v91
    %v484 = vunpack.c.l.b16 %v92
    %v485 = vunpack.c.l.b16 %v93
    %v486 = vunpack.c.l.b16 %v94
    %v487 = vunpack.c.l.b16 %v95
    %v488 = vunpack.c.l.b16 %v96
    %v489 = vunpack.c.l.b16 %v97
    %v490 = vunpack.c.l.b16 %v98
    %v491 = vunpack.c.l.b16 %v99
    %v492 = vunpack.c.l.b16 %v100
    %v493 = vunpack.c.l.b16 %v101
    %v494 = vunpack.c.l.b16 %v102
    %v495 = vunpack.c.l.b16 %v103
    %v496 = vunpack.c.l.b16 %v104
    %v497 = vunpack.c.l.b16 %v105
    %v498 = vunpack.c.l.b16 %v106
    %v499 = vunpack.c.l.b16 %v107
    %v500 = vunpack.c.l.b16 %v108
    %v501 = vunpack.c.l.b16 %v109
    %v502 = vunpack.c.l.b16 %v110
    %v503 = vunpack.c.l.b16 %v111
    %v504 = vunpack.c.l.b16 %v112
    %v505 = vunpack.c.l.b16 %v113
    %v506 = vunpack.c.l.b16 %v114
    %v507 = vunpack.c.l.b16 %v115
    %v508 = vunpack.c.l.b16 %v116
    %v509 = vunpack.c.l.b16 %v117
    %v510 = vunpack.c.l.b16 %v118
    %v511 = vunpack.c.l.b16 %v119
    %v512 = vunpack.c.l.b16 %v120
    %v513 = vunpack.c.l.b16 %v121
    %v514 = vunpack.c.l.b16 %v122
    %v515 = vunpack.c.l.b16 %v123
    %v516 = vunpack.c.l.b16 %v124
    %v517 = vunpack.c.l.b16 %v125
    %v518 = vunpack.c.l.b16 %v126
    %v519 = vunpack.c.l.b16 %v127
    %v520 = vunpack.c.l.b16 %v128
    %v521 = vunpack.c.l.b16 %v129
    %v522 = vunpack.c.l.b16 %v130
    %v523 = vunpack.c.l.b16 %v131
    %v524 = vunpack.c.l.b16 %v132
    %v525 = vunpack.c.l.b16 %v133
    %v526 = vunpack.c.l.b16 %v134
    %v527 = vunpack.c.l.b16 %v135
    %v528 = vunpack.c.l.b16 %v136
    %v529 = vunpack.c.l.b16 %v137
    %v530 = vunpack.c.l.b16 %v138
    %v531 = vunpack.c.l.b16 %v139
    %v532 = vunpack.c.l.b16 %v140
    %v533 = vunpack.c.l.b16 %v141
    %v534 = vunpack.c.l.b16 %v142
    %v535 = vunpack.c.l.b16 %v143
    %v536 = vunpack.c.l.b16 %v144
    %v537 = vunpack.c.l.b16 %v145
    %v538 = vunpack.c.l.b16 %v146
    %v539 = vunpack.c.l.b16 %v147
    %v540 = vunpack.c.l.b16 %v148
    %v541 = vunpack.c.l.b16 %v149
    %v542 = vpack.c.b16 %v415, %v414
    %v543 = vpack.c.b16 %v417, %v416
    %v544 = vpack.c.b16 %v419, %v418
    %v545 = vpack.c.b16 %v421, %v420
    %v546 = vpack.c.b16 %v423, %v422
    %v547 = vpack.c.b16 %v425, %v424
    %v548 = vpack.c.b16 %v427, %v426
    %v549 = vpack.c.b16 %v429, %v428
    %v550 = vpack.c.b16 %v431, %v430
    %v551 = vpack.c.b16 %v433, %v432
    %v552 = vpack.c.b16 %v435, %v434
    %v553 = vpack.c.b16 %v437, %v436
    %v554 = vpack.c.b16 %v439, %v438
    %v555 = vpack.c.b16 %v441, %v440
    %v556 = vpack.c.b16 %v443, %v442
    %v557 = vpack.c.b16 %v445, %v444
    %v558 = vpack.c.b16 %v447, %v446
    %v559 = vpack.c.b16 %v449, %v448
    %v560 = vpack.c.b16 %v451, %v450
    %v561 = vpack.c.b16 %v453, %v452
    %v562 = vpack.c.b16 %v455, %v454
    %v563 = vpack.c.b16 %v457, %v456
    %v564 = vpack.c.b16 %v459, %v458
    %v565 = vpack.c.b16 %v461, %v460
    %v566 = vpack.c.b16 %v463, %v462
    %v567 = vpack.c.b16 %v465, %v464
    %v568 = vpack.c.b16 %v467, %v466
    %v569 = vpack.c.b16 %v469, %v468
    %v570 = vpack.c.b16 %v471, %v470
    %v571 = vpack.c.b16 %v473, %v472
    %v572 = vpack.c.b16 %v475, %v474
    %v573 = vpack.c.b16 %v477, %v476
    %v574 = vpack.c.b16 %v479, %v478
    %v575 = vpack.c.b16 %v481, %v480
    %v576 = vpack.c.b16 %v483, %v482
    %v577 = vpack.c.b16 %v485, %v484
    %v578 = vpack.c.b16 %v487, %v486
    %v579 = vpack.c.b16 %v489, %v488
    %v580 = vpack.c.b16 %v491, %v490
    %v581 = vpack.c.b16 %v493, %v492
    %v582 = vpack.c.b16 %v495, %v494
    %v583 = vpack.c.b16 %v497, %v496
    %v584 = vpack.c.b16 %v499, %v498
    %v585 = vpack.c.b16 %v501, %v500
    %v586 = vpack.c.b16 %v503, %v502
    %v587 = vpack.c.b16 %v505, %v504
    %v588 = vpack.c.b16 %v507, %v506
    %v589 = vpack.c.b16 %v509, %v508
    %v590 = vpack.c.b16 %v511, %v510
    %v591 = vpack.c.b16 %v513, %v512
    %v592 = vpack.c.b16 %v515, %v514
    %v593 = vpack.c.b16 %v517, %v516
    %v594 = vpack.c.b16 %v519, %v518
    %v595 = vpack.c.b16 %v521, %v520
    %v596 = vpack.c.b16 %v523, %v522
    %v597 = vpack.c.b16 %v525, %v524
    %v598 = vpack.c.b16 %v527, %v526
    %v599 = vpack.c.b16 %v529, %v528
    %v600 = vpack.c.b16 %v531, %v530
    %v601 = vpack.c.b16 %v533, %v532
    %v602 = vpack.c.b16 %v535, %v534
    %v603 = vpack.c.b16 %v537, %v536
    %v604 = vpack.c.b16 %v539, %v538
    %v605 = vpack.c.b16 %v541, %v540
    %vm606 = vcmask 64512
    %v608 = vsel %vm606, %v542, 0
    %v611 = vsel %vm606, %v543, 0
    %v614 = vsel %vm606, %v544, 0
    %v617 = vsel %vm606, %v545, 0
    %v620 = vsel %vm606, %v546, 0
    %v623 = vsel %vm606, %v547, 0
    %v626 = vsel %vm606, %v548, 0
    %v629 = vsel %vm606, %v549, 0
    %v632 = vsel %vm606, %v550, 0
    %v635 = vsel %vm606, %v551, 0
    %v638 = vsel %vm606, %v552, 0
    %v641 = vsel %vm606, %v553, 0
    %v644 = vsel %vm606, %v554, 0
    %v647 = vsel %vm606, %v555, 0
    %v650 = vsel %vm606, %v556, 0
    %v653 = vsel %vm606, %v557, 0
    %v656 = vsel %vm606, %v558, 0
    %v659 = vsel %vm606, %v559, 0
    %v662 = vsel %vm606, %v560, 0
    %v665 = vsel %vm606, %v561, 0
    %v668 = vsel %vm606, %v562, 0
    %v671 = vsel %vm606, %v563, 0
    %v674 = vsel %vm606, %v564, 0
    %v677 = vsel %vm606, %v565, 0
    %v680 = vsel %vm606, %v566, 0
    %v683 = vsel %vm606, %v567, 0
    %v686 = vsel %vm606, %v568, 0
    %v689 = vsel %vm606, %v569, 0
    %v692 = vsel %vm606, %v570, 0
    %v695 = vsel %vm606, %v571, 0
    %v698 = vsel %vm606, %v572, 0
    %v701 = vsel %vm606, %v573, 0
    %v704 = vsel %vm606, %v574, 0
    %v707 = vsel %vm606, %v575, 0
    %v710 = vsel %vm606, %v576, 0
    %v713 = vsel %vm606, %v577, 0
    %v716 = vsel %vm606, %v578, 0
    %v719 = vsel %vm606, %v579, 0
    %v722 = vsel %vm606, %v580, 0
    %v725 = vsel %vm606, %v581, 0
    %v728 = vsel %vm606, %v582, 0
    %v731 = vsel %vm606, %v583, 0
    %v734 = vsel %vm606, %v584, 0
    %v737 = vsel %vm606, %v585, 0
    %v740 = vsel %vm606, %v586, 0
    %v743 = vsel %vm606, %v587, 0
    %v746 = vsel %vm606, %v588, 0
    %v749 = vsel %vm606, %v589, 0
    %v752 = vsel %vm606, %v590, 0
    %v755 = vsel %vm606, %v591, 0
    %v758 = vsel %vm606, %v592, 0
    %v761 = vsel %vm606, %v593, 0
    %v764 = vsel %vm606, %v594, 0
    %v767 = vsel %vm606, %v595, 0
    %v770 = vsel %vm606, %v596, 0
    %v773 = vsel %vm606, %v597, 0
    %v776 = vsel %vm606, %v598, 0
    %v779 = vsel %vm606, %v599, 0
    %v782 = vsel %vm606, %v600, 0
    %v785 = vsel %vm606, %v601, 0
    %v788 = vsel %vm606, %v602, 0
    %v791 = vsel %vm606, %v603, 0
    %v794 = vsel %vm606, %v604, 0
    %v797 = vsel %vm606, %v605, 0
    %vm799 = vcmask 1043456
    %v801 = vsel %vm799, %v278, 0
    %803 = vmatprep.subr.bf16.mxu0 0
    %804 = vmatpush1.bf16.msra.mxu0 %v801
    %805 = vmatprep.subr.bf16.mxu0 0
    %806 = vmatpush1.bf16.msra.mxu0 0
    %807 = vmatprep.subr.bf16.mxu0 0
    %808 = vmatpush1.bf16.msra.mxu0 0
    %809 = vmatprep.subr.bf16.mxu0 0
    %810 = vmatpush1.bf16.msra.mxu0 0
    %811 = vmatprep.subr.bf16.mxu0 0
    %812 = vmatpush1.bf16.msra.mxu0 0
    %813 = vmatprep.subr.bf16.mxu0 0
    %814 = vmatpush1.bf16.msra.mxu0 0
    %815 = vmatprep.subr.bf16.mxu0 0
    %816 = vmatpush1.bf16.msra.mxu0 0
    %817 = vmatprep.subr.bf16.mxu0 0
    %818 = vmatpush1.bf16.msra.mxu0 0
    %819 = vmatprep.subr.bf16.mxu0 0
    %820 = vmatpush1.bf16.msra.mxu0 0
    %821 = vmatprep.subr.bf16.mxu0 0
    %822 = vmatpush1.bf16.msra.mxu0 0
    %823 = vmatprep.subr.bf16.mxu0 0
    %824 = vmatpush1.bf16.msra.mxu0 0
    %825 = vmatprep.subr.bf16.mxu0 0
    %826 = vmatpush1.bf16.msra.mxu0 0
    %827 = vmatprep.subr.bf16.mxu0 0
    %828 = vmatpush1.bf16.msra.mxu0 0
    %829 = vmatprep.subr.bf16.mxu0 0
    %830 = vmatpush1.bf16.msra.mxu0 0
    %831 = vmatprep.subr.bf16.mxu0 0
    %832 = vmatpush1.bf16.msra.mxu0 0
    %833 = vmatprep.subr.bf16.mxu0 0
    %834 = vmatpush1.bf16.msra.mxu0 0
    %835 = vmatprep.mubr.bf16.mxu0 0
    %836 = vmatmul.mubr.bf16.gmra.mrb[0].mxu0 %v608
    %v837 = vpop.f32.mrb[0].mxu0
    %v838 = vadd.f32 %v284, %v837
    %v839 = vpop.f32.mrb[0].mxu0
    %v840 = vpop.f32.mrb[0].mxu0
    %v841 = vadd.f32 %v284, %v840
    %v842 = vpop.f32.mrb[0].mxu0
    %843 = vmatprep.mubr.bf16.mxu0 0
    %844 = vmatmul.mubr.bf16.gmra.mrb[0].mxu0 %v611
    %v845 = vpop.f32.mrb[0].mxu0
    %v846 = vadd.f32 %v284, %v845
    %v847 = vpop.f32.mrb[0].mxu0
    %v848 = vpop.f32.mrb[0].mxu0
    %v849 = vadd.f32 %v284, %v848
    %v850 = vpop.f32.mrb[0].mxu0
    %851 = vmatprep.mubr.bf16.mxu0 0
    %852 = vmatmul.mubr.bf16.gmra.mrb[0].mxu0 %v614
    %v853 = vpop.f32.mrb[0].mxu0
    %v854 = vadd.f32 %v284, %v853
    %v855 = vpop.f32.mrb[0].mxu0
    %v856 = vpop.f32.mrb[0].mxu0
    %v857 = vadd.f32 %v284, %v856
    %v858 = vpop.f32.mrb[0].mxu0
    %859 = vmatprep.mubr.bf16.mxu0 0
    %860 = vmatmul.mubr.bf16.gmra.mrb[0].mxu0 %v617
    %v861 = vpop.f32.mrb[0].mxu0
    %v862 = vadd.f32 %v284, %v861
    %v863 = vpop.f32.mrb[0].mxu0
    %v864 = vpop.f32.mrb[0].mxu0
    %v865 = vadd.f32 %v284, %v864
    %v866 = vpop.f32.mrb[0].mxu0
    %867 = vmatprep.mubr.bf16.mxu0 0
    %868 = vmatmul.mubr.bf16.gmra.mrb[0].mxu0 %v620
    %v869 = vpop.f32.mrb[0].mxu0
    %v870 = vadd.f32 %v284, %v869
    %v871 = vpop.f32.mrb[0].mxu0
    %v872 = vpop.f32.mrb[0].mxu0
    %v873 = vadd.f32 %v284, %v872
    %v874 = vpop.f32.mrb[0].mxu0
    %875 = vmatprep.mubr.bf16.mxu0 0
    %876 = vmatmul.mubr.bf16.gmra.mrb[0].mxu0 %v623
    %v877 = vpop.f32.mrb[0].mxu0
    %v878 = vadd.f32 %v284, %v877
    %v879 = vpop.f32.mrb[0].mxu0
    %v880 = vpop.f32.mrb[0].mxu0
    %v881 = vadd.f32 %v284, %v880
    %v882 = vpop.f32.mrb[0].mxu0
    %883 = vmatprep.mubr.bf16.mxu0 0
    %884 = vmatmul.mubr.bf16.gmra.mrb[0].mxu0 %v626
    %v885 = vpop.f32.mrb[0].mxu0
    %v886 = vadd.f32 %v284, %v885
    %v887 = vpop.f32.mrb[0].mxu0
    %v888 = vpop.f32.mrb[0].mxu0
    %v889 = vadd.f32 %v284, %v888
    %v890 = vpop.f32.mrb[0].mxu0
    %891 = vmatprep.mubr.bf16.mxu0 0
    %892 = vmatmul.mubr.bf16.gmra.mrb[0].mxu0 %v629
    %v893 = vpop.f32.mrb[0].mxu0
    %v894 = vadd.f32 %v284, %v893
    %v895 = vpop.f32.mrb[0].mxu0
    %v896 = vpop.f32.mrb[0].mxu0
    %v897 = vadd.f32 %v284, %v896
    %v898 = vpop.f32.mrb[0].mxu0
    %899 = vmatprep.mubr.bf16.mxu0 0
    %900 = vmatmul.mubr.bf16.gmra.mrb[0].mxu0 %v632
    %v901 = vpop.f32.mrb[0].mxu0
    %v902 = vadd.f32 %v284, %v901
    %v903 = vpop.f32.mrb[0].mxu0
    %v904 = vpop.f32.mrb[0].mxu0
    %v905 = vadd.f32 %v284, %v904
    %v906 = vpop.f32.mrb[0].mxu0
    %907 = vmatprep.mubr.bf16.mxu0 0
    %908 = vmatmul.mubr.bf16.gmra.mrb[0].mxu0 %v635
    %v909 = vpop.f32.mrb[0].mxu0
    %v910 = vadd.f32 %v284, %v909
    %v911 = vpop.f32.mrb[0].mxu0
    %v912 = vpop.f32.mrb[0].mxu0
    %v913 = vadd.f32 %v284, %v912
    %v914 = vpop.f32.mrb[0].mxu0
    %915 = vmatprep.mubr.bf16.mxu0 0
    %916 = vmatmul.mubr.bf16.gmra.mrb[0].mxu0 %v638
    %v917 = vpop.f32.mrb[0].mxu0
    %v918 = vadd.f32 %v284, %v917
    %v919 = vpop.f32.mrb[0].mxu0
    %v920 = vpop.f32.mrb[0].mxu0
    %v921 = vadd.f32 %v284, %v920
    %v922 = vpop.f32.mrb[0].mxu0
    %923 = vmatprep.mubr.bf16.mxu0 0
    %924 = vmatmul.mubr.bf16.gmra.mrb[0].mxu0 %v641
    %v925 = vpop.f32.mrb[0].mxu0
    %v926 = vadd.f32 %v284, %v925
    %v927 = vpop.f32.mrb[0].mxu0
    %v928 = vpop.f32.mrb[0].mxu0
    %v929 = vadd.f32 %v284, %v928
    %v930 = vpop.f32.mrb[0].mxu0
    %931 = vmatprep.mubr.bf16.mxu0 0
    %932 = vmatmul.mubr.bf16.gmra.mrb[0].mxu0 %v644
    %v933 = vpop.f32.mrb[0].mxu0
    %v934 = vadd.f32 %v284, %v933
    %v935 = vpop.f32.mrb[0].mxu0
    %v936 = vpop.f32.mrb[0].mxu0
    %v937 = vadd.f32 %v284, %v936
    %v938 = vpop.f32.mrb[0].mxu0
    %939 = vmatprep.mubr.bf16.mxu0 0
    %940 = vmatmul.mubr.bf16.gmra.mrb[0].mxu0 %v647
    %v941 = vpop.f32.mrb[0].mxu0
    %v942 = vadd.f32 %v284, %v941
    %v943 = vpop.f32.mrb[0].mxu0
    %v944 = vpop.f32.mrb[0].mxu0
    %v945 = vadd.f32 %v284, %v944
    %v946 = vpop.f32.mrb[0].mxu0
    %947 = vmatprep.mubr.bf16.mxu0 0
    %948 = vmatmul.mubr.bf16.gmra.mrb[0].mxu0 %v650
    %v949 = vpop.f32.mrb[0].mxu0
    %v950 = vadd.f32 %v284, %v949
    %v951 = vpop.f32.mrb[0].mxu0
    %v952 = vpop.f32.mrb[0].mxu0
    %v953 = vadd.f32 %v284, %v952
    %v954 = vpop.f32.mrb[0].mxu0
    %955 = vmatprep.mubr.bf16.mxu0 0
    %956 = vmatmul.mubr.bf16.gmra.mrb[0].mxu0 %v653
    %v957 = vpop.f32.mrb[0].mxu0
    %v958 = vadd.f32 %v284, %v957
    %v959 = vpop.f32.mrb[0].mxu0
    %v960 = vpop.f32.mrb[0].mxu0
    %v961 = vadd.f32 %v284, %v960
    %v962 = vpop.f32.mrb[0].mxu0
    %963 = vmatprep.mubr.bf16.mxu0 0
    %964 = vmatmul.mubr.bf16.gmra.mrb[0].mxu0 %v656
    %v965 = vpop.f32.mrb[0].mxu0
    %v966 = vadd.f32 %v284, %v965
    %v967 = vpop.f32.mrb[0].mxu0
    %v968 = vpop.f32.mrb[0].mxu0
    %v969 = vadd.f32 %v284, %v968
    %v970 = vpop.f32.mrb[0].mxu0
    %971 = vmatprep.mubr.bf16.mxu0 0
    %972 = vmatmul.mubr.bf16.gmra.mrb[0].mxu0 %v659
    %v973 = vpop.f32.mrb[0].mxu0
    %v974 = vadd.f32 %v284, %v973
    %v975 = vpop.f32.mrb[0].mxu0
    %v976 = vpop.f32.mrb[0].mxu0
    %v977 = vadd.f32 %v284, %v976
    %v978 = vpop.f32.mrb[0].mxu0
    %979 = vmatprep.mubr.bf16.mxu0 0
    %980 = vmatmul.mubr.bf16.gmra.mrb[0].mxu0 %v662
    %v981 = vpop.f32.mrb[0].mxu0
    %v982 = vadd.f32 %v284, %v981
    %v983 = vpop.f32.mrb[0].mxu0
    %v984 = vpop.f32.mrb[0].mxu0
    %v985 = vadd.f32 %v284, %v984
    %v986 = vpop.f32.mrb[0].mxu0
    %987 = vmatprep.mubr.bf16.mxu0 0
    %988 = vmatmul.mubr.bf16.gmra.mrb[0].mxu0 %v665
    %v989 = vpop.f32.mrb[0].mxu0
    %v990 = vadd.f32 %v284, %v989
    %v991 = vpop.f32.mrb[0].mxu0
    %v992 = vpop.f32.mrb[0].mxu0
    %v993 = vadd.f32 %v284, %v992
    %v994 = vpop.f32.mrb[0].mxu0
    %995 = vmatprep.mubr.bf16.mxu0 0
    %996 = vmatmul.mubr.bf16.gmra.mrb[0].mxu0 %v668
    %v997 = vpop.f32.mrb[0].mxu0
    %v998 = vadd.f32 %v284, %v997
    %v999 = vpop.f32.mrb[0].mxu0
    %v1000 = vpop.f32.mrb[0].mxu0
    %v1001 = vadd.f32 %v284, %v1000
    %v1002 = vpop.f32.mrb[0].mxu0
    %1003 = vmatprep.mubr.bf16.mxu0 0
    %1004 = vmatmul.mubr.bf16.gmra.mrb[0].mxu0 %v671
    %v1005 = vpop.f32.mrb[0].mxu0
    %v1006 = vadd.f32 %v284, %v1005
    %v1007 = vpop.f32.mrb[0].mxu0
    %v1008 = vpop.f32.mrb[0].mxu0
    %v1009 = vadd.f32 %v284, %v1008
    %v1010 = vpop.f32.mrb[0].mxu0
    %1011 = vmatprep.mubr.bf16.mxu0 0
    %1012 = vmatmul.mubr.bf16.gmra.mrb[0].mxu0 %v674
    %v1013 = vpop.f32.mrb[0].mxu0
    %v1014 = vadd.f32 %v284, %v1013
    %v1015 = vpop.f32.mrb[0].mxu0
    %v1016 = vpop.f32.mrb[0].mxu0
    %v1017 = vadd.f32 %v284, %v1016
    %v1018 = vpop.f32.mrb[0].mxu0
    %1019 = vmatprep.mubr.bf16.mxu0 0
    %1020 = vmatmul.mubr.bf16.gmra.mrb[0].mxu0 %v677
    %v1021 = vpop.f32.mrb[0].mxu0
    %v1022 = vadd.f32 %v284, %v1021
    %v1023 = vpop.f32.mrb[0].mxu0
    %v1024 = vpop.f32.mrb[0].mxu0
    %v1025 = vadd.f32 %v284, %v1024
    %v1026 = vpop.f32.mrb[0].mxu0
    %1027 = vmatprep.mubr.bf16.mxu0 0
    %1028 = vmatmul.mubr.bf16.gmra.mrb[0].mxu0 %v680
    %v1029 = vpop.f32.mrb[0].mxu0
    %v1030 = vadd.f32 %v284, %v1029
    %v1031 = vpop.f32.mrb[0].mxu0
    %v1032 = vpop.f32.mrb[0].mxu0
    %v1033 = vadd.f32 %v284, %v1032
    %v1034 = vpop.f32.mrb[0].mxu0
    %1035 = vmatprep.mubr.bf16.mxu0 0
    %1036 = vmatmul.mubr.bf16.gmra.mrb[0].mxu0 %v683
    %v1037 = vpop.f32.mrb[0].mxu0
    %v1038 = vadd.f32 %v284, %v1037
    %v1039 = vpop.f32.mrb[0].mxu0
    %v1040 = vpop.f32.mrb[0].mxu0
    %v1041 = vadd.f32 %v284, %v1040
    %v1042 = vpop.f32.mrb[0].mxu0
    %1043 = vmatprep.mubr.bf16.mxu0 0
    %1044 = vmatmul.mubr.bf16.gmra.mrb[0].mxu0 %v686
    %v1045 = vpop.f32.mrb[0].mxu0
    %v1046 = vadd.f32 %v284, %v1045
    %v1047 = vpop.f32.mrb[0].mxu0
    %v1048 = vpop.f32.mrb[0].mxu0
    %v1049 = vadd.f32 %v284, %v1048
    %v1050 = vpop.f32.mrb[0].mxu0
    %1051 = vmatprep.mubr.bf16.mxu0 0
    %1052 = vmatmul.mubr.bf16.gmra.mrb[0].mxu0 %v689
    %v1053 = vpop.f32.mrb[0].mxu0
    %v1054 = vadd.f32 %v284, %v1053
    %v1055 = vpop.f32.mrb[0].mxu0
    %v1056 = vpop.f32.mrb[0].mxu0
    %v1057 = vadd.f32 %v284, %v1056
    %v1058 = vpop.f32.mrb[0].mxu0
    %1059 = vmatprep.mubr.bf16.mxu0 0
    %1060 = vmatmul.mubr.bf16.gmra.mrb[0].mxu0 %v692
    %v1061 = vpop.f32.mrb[0].mxu0
    %v1062 = vadd.f32 %v284, %v1061
    %v1063 = vpop.f32.mrb[0].mxu0
    %v1064 = vpop.f32.mrb[0].mxu0
    %v1065 = vadd.f32 %v284, %v1064
    %v1066 = vpop.f32.mrb[0].mxu0
    %1067 = vmatprep.mubr.bf16.mxu0 0
    %1068 = vmatmul.mubr.bf16.gmra.mrb[0].mxu0 %v695
    %v1069 = vpop.f32.mrb[0].mxu0
    %v1070 = vadd.f32 %v284, %v1069
    %v1071 = vpop.f32.mrb[0].mxu0
    %v1072 = vpop.f32.mrb[0].mxu0
    %v1073 = vadd.f32 %v284, %v1072
    %v1074 = vpop.f32.mrb[0].mxu0
    %1075 = vmatprep.mubr.bf16.mxu0 0
    %1076 = vmatmul.mubr.bf16.gmra.mrb[0].mxu0 %v698
    %v1077 = vpop.f32.mrb[0].mxu0
    %v1078 = vadd.f32 %v284, %v1077
    %v1079 = vpop.f32.mrb[0].mxu0
    %v1080 = vpop.f32.mrb[0].mxu0
    %v1081 = vadd.f32 %v284, %v1080
    %v1082 = vpop.f32.mrb[0].mxu0
    %1083 = vmatprep.mubr.bf16.mxu0 0
    %1084 = vmatmul.mubr.bf16.gmra.mrb[0].mxu0 %v701
    %v1085 = vpop.f32.mrb[0].mxu0
    %v1086 = vadd.f32 %v284, %v1085
    %v1087 = vpop.f32.mrb[0].mxu0
    %v1088 = vpop.f32.mrb[0].mxu0
    %v1089 = vadd.f32 %v284, %v1088
    %v1090 = vpop.f32.mrb[0].mxu0
    %1091 = vmatprep.mubr.bf16.mxu0 0
    %1092 = vmatmul.mubr.bf16.gmra.mrb[0].mxu0 %v704
    %v1093 = vpop.f32.mrb[0].mxu0
    %v1094 = vadd.f32 %v284, %v1093
    %v1095 = vpop.f32.mrb[0].mxu0
    %v1096 = vpop.f32.mrb[0].mxu0
    %v1097 = vadd.f32 %v284, %v1096
    %v1098 = vpop.f32.mrb[0].mxu0
    %1099 = vmatprep.mubr.bf16.mxu0 0
    %1100 = vmatmul.mubr.bf16.gmra.mrb[0].mxu0 %v707
    %v1101 = vpop.f32.mrb[0].mxu0
    %v1102 = vadd.f32 %v284, %v1101
    %v1103 = vpop.f32.mrb[0].mxu0
    %v1104 = vpop.f32.mrb[0].mxu0
    %v1105 = vadd.f32 %v284, %v1104
    %v1106 = vpop.f32.mrb[0].mxu0
    %1107 = vmatprep.mubr.bf16.mxu0 0
    %1108 = vmatmul.mubr.bf16.gmra.mrb[0].mxu0 %v710
    %v1109 = vpop.f32.mrb[0].mxu0
    %v1110 = vadd.f32 %v284, %v1109
    %v1111 = vpop.f32.mrb[0].mxu0
    %v1112 = vpop.f32.mrb[0].mxu0
    %v1113 = vadd.f32 %v284, %v1112
    %v1114 = vpop.f32.mrb[0].mxu0
    %1115 = vmatprep.mubr.bf16.mxu0 0
    %1116 = vmatmul.mubr.bf16.gmra.mrb[0].mxu0 %v713
    %v1117 = vpop.f32.mrb[0].mxu0
    %v1118 = vadd.f32 %v284, %v1117
    %v1119 = vpop.f32.mrb[0].mxu0
    %v1120 = vpop.f32.mrb[0].mxu0
    %v1121 = vadd.f32 %v284, %v1120
    %v1122 = vpop.f32.mrb[0].mxu0
    %1123 = vmatprep.mubr.bf16.mxu0 0
    %1124 = vmatmul.mubr.bf16.gmra.mrb[0].mxu0 %v716
    %v1125 = vpop.f32.mrb[0].mxu0
    %v1126 = vadd.f32 %v284, %v1125
    %v1127 = vpop.f32.mrb[0].mxu0
    %v1128 = vpop.f32.mrb[0].mxu0
    %v1129 = vadd.f32 %v284, %v1128
    %v1130 = vpop.f32.mrb[0].mxu0
    %1131 = vmatprep.mubr.bf16.mxu0 0
    %1132 = vmatmul.mubr.bf16.gmra.mrb[0].mxu0 %v719
    %v1133 = vpop.f32.mrb[0].mxu0
    %v1134 = vadd.f32 %v284, %v1133
    %v1135 = vpop.f32.mrb[0].mxu0
    %v1136 = vpop.f32.mrb[0].mxu0
    %v1137 = vadd.f32 %v284, %v1136
    %v1138 = vpop.f32.mrb[0].mxu0
    %1139 = vmatprep.mubr.bf16.mxu0 0
    %1140 = vmatmul.mubr.bf16.gmra.mrb[0].mxu0 %v722
    %v1141 = vpop.f32.mrb[0].mxu0
    %v1142 = vadd.f32 %v284, %v1141
    %v1143 = vpop.f32.mrb[0].mxu0
    %v1144 = vpop.f32.mrb[0].mxu0
    %v1145 = vadd.f32 %v284, %v1144
    %v1146 = vpop.f32.mrb[0].mxu0
    %1147 = vmatprep.mubr.bf16.mxu0 0
    %1148 = vmatmul.mubr.bf16.gmra.mrb[0].mxu0 %v725
    %v1149 = vpop.f32.mrb[0].mxu0
    %v1150 = vadd.f32 %v284, %v1149
    %v1151 = vpop.f32.mrb[0].mxu0
    %v1152 = vpop.f32.mrb[0].mxu0
    %v1153 = vadd.f32 %v284, %v1152
    %v1154 = vpop.f32.mrb[0].mxu0
    %1155 = vmatprep.mubr.bf16.mxu0 0
    %1156 = vmatmul.mubr.bf16.gmra.mrb[0].mxu0 %v728
    %v1157 = vpop.f32.mrb[0].mxu0
    %v1158 = vadd.f32 %v284, %v1157
    %v1159 = vpop.f32.mrb[0].mxu0
    %v1160 = vpop.f32.mrb[0].mxu0
    %v1161 = vadd.f32 %v284, %v1160
    %v1162 = vpop.f32.mrb[0].mxu0
    %1163 = vmatprep.mubr.bf16.mxu0 0
    %1164 = vmatmul.mubr.bf16.gmra.mrb[0].mxu0 %v731
    %v1165 = vpop.f32.mrb[0].mxu0
    %v1166 = vadd.f32 %v284, %v1165
    %v1167 = vpop.f32.mrb[0].mxu0
    %v1168 = vpop.f32.mrb[0].mxu0
    %v1169 = vadd.f32 %v284, %v1168
    %v1170 = vpop.f32.mrb[0].mxu0
    %1171 = vmatprep.mubr.bf16.mxu0 0
    %1172 = vmatmul.mubr.bf16.gmra.mrb[0].mxu0 %v734
    %v1173 = vpop.f32.mrb[0].mxu0
    %v1174 = vadd.f32 %v284, %v1173
    %v1175 = vpop.f32.mrb[0].mxu0
    %v1176 = vpop.f32.mrb[0].mxu0
    %v1177 = vadd.f32 %v284, %v1176
    %v1178 = vpop.f32.mrb[0].mxu0
    %1179 = vmatprep.mubr.bf16.mxu0 0
    %1180 = vmatmul.mubr.bf16.gmra.mrb[0].mxu0 %v737
    %v1181 = vpop.f32.mrb[0].mxu0
    %v1182 = vadd.f32 %v284, %v1181
    %v1183 = vpop.f32.mrb[0].mxu0
    %v1184 = vpop.f32.mrb[0].mxu0
    %v1185 = vadd.f32 %v284, %v1184
    %v1186 = vpop.f32.mrb[0].mxu0
    %1187 = vmatprep.mubr.bf16.mxu0 0
    %1188 = vmatmul.mubr.bf16.gmra.mrb[0].mxu0 %v740
    %v1189 = vpop.f32.mrb[0].mxu0
    %v1190 = vadd.f32 %v284, %v1189
    %v1191 = vpop.f32.mrb[0].mxu0
    %v1192 = vpop.f32.mrb[0].mxu0
    %v1193 = vadd.f32 %v284, %v1192
    %v1194 = vpop.f32.mrb[0].mxu0
    %1195 = vmatprep.mubr.bf16.mxu0 0
    %1196 = vmatmul.mubr.bf16.gmra.mrb[0].mxu0 %v743
    %v1197 = vpop.f32.mrb[0].mxu0
    %v1198 = vadd.f32 %v284, %v1197
    %v1199 = vpop.f32.mrb[0].mxu0
    %v1200 = vpop.f32.mrb[0].mxu0
    %v1201 = vadd.f32 %v284, %v1200
    %v1202 = vpop.f32.mrb[0].mxu0
    %1203 = vmatprep.mubr.bf16.mxu0 0
    %1204 = vmatmul.mubr.bf16.gmra.mrb[0].mxu0 %v746
    %v1205 = vpop.f32.mrb[0].mxu0
    %v1206 = vadd.f32 %v284, %v1205
    %v1207 = vpop.f32.mrb[0].mxu0
    %v1208 = vpop.f32.mrb[0].mxu0
    %v1209 = vadd.f32 %v284, %v1208
    %v1210 = vpop.f32.mrb[0].mxu0
    %1211 = vmatprep.mubr.bf16.mxu0 0
    %1212 = vmatmul.mubr.bf16.gmra.mrb[0].mxu0 %v749
    %v1213 = vpop.f32.mrb[0].mxu0
    %v1214 = vadd.f32 %v284, %v1213
    %v1215 = vpop.f32.mrb[0].mxu0
    %v1216 = vpop.f32.mrb[0].mxu0
    %v1217 = vadd.f32 %v284, %v1216
    %v1218 = vpop.f32.mrb[0].mxu0
    %1219 = vmatprep.mubr.bf16.mxu0 0
    %1220 = vmatmul.mubr.bf16.gmra.mrb[0].mxu0 %v752
    %v1221 = vpop.f32.mrb[0].mxu0
    %v1222 = vadd.f32 %v284, %v1221
    %v1223 = vpop.f32.mrb[0].mxu0
    %v1224 = vpop.f32.mrb[0].mxu0
    %v1225 = vadd.f32 %v284, %v1224
    %v1226 = vpop.f32.mrb[0].mxu0
    %1227 = vmatprep.mubr.bf16.mxu0 0
    %1228 = vmatmul.mubr.bf16.gmra.mrb[0].mxu0 %v755
    %v1229 = vpop.f32.mrb[0].mxu0
    %v1230 = vadd.f32 %v284, %v1229
    %v1231 = vpop.f32.mrb[0].mxu0
    %v1232 = vpop.f32.mrb[0].mxu0
    %v1233 = vadd.f32 %v284, %v1232
    %v1234 = vpop.f32.mrb[0].mxu0
    %1235 = vmatprep.mubr.bf16.mxu0 0
    %1236 = vmatmul.mubr.bf16.gmra.mrb[0].mxu0 %v758
    %v1237 = vpop.f32.mrb[0].mxu0
    %v1238 = vadd.f32 %v284, %v1237
    %v1239 = vpop.f32.mrb[0].mxu0
    %v1240 = vpop.f32.mrb[0].mxu0
    %v1241 = vadd.f32 %v284, %v1240
    %v1242 = vpop.f32.mrb[0].mxu0
    %1243 = vmatprep.mubr.bf16.mxu0 0
    %1244 = vmatmul.mubr.bf16.gmra.mrb[0].mxu0 %v761
    %v1245 = vpop.f32.mrb[0].mxu0
    %v1246 = vadd.f32 %v284, %v1245
    %v1247 = vpop.f32.mrb[0].mxu0
    %v1248 = vpop.f32.mrb[0].mxu0
    %v1249 = vadd.f32 %v284, %v1248
    %v1250 = vpop.f32.mrb[0].mxu0
    %1251 = vmatprep.mubr.bf16.mxu0 0
    %1252 = vmatmul.mubr.bf16.gmra.mrb[0].mxu0 %v764
    %v1253 = vpop.f32.mrb[0].mxu0
    %v1254 = vadd.f32 %v284, %v1253
    %v1255 = vpop.f32.mrb[0].mxu0
    %v1256 = vpop.f32.mrb[0].mxu0
    %v1257 = vadd.f32 %v284, %v1256
    %v1258 = vpop.f32.mrb[0].mxu0
    %1259 = vmatprep.mubr.bf16.mxu0 0
    %1260 = vmatmul.mubr.bf16.gmra.mrb[0].mxu0 %v767
    %v1261 = vpop.f32.mrb[0].mxu0
    %v1262 = vadd.f32 %v284, %v1261
    %v1263 = vpop.f32.mrb[0].mxu0
    %v1264 = vpop.f32.mrb[0].mxu0
    %v1265 = vadd.f32 %v284, %v1264
    %v1266 = vpop.f32.mrb[0].mxu0
    %1267 = vmatprep.mubr.bf16.mxu0 0
    %1268 = vmatmul.mubr.bf16.gmra.mrb[0].mxu0 %v770
    %v1269 = vpop.f32.mrb[0].mxu0
    %v1270 = vadd.f32 %v284, %v1269
    %v1271 = vpop.f32.mrb[0].mxu0
    %v1272 = vpop.f32.mrb[0].mxu0
    %v1273 = vadd.f32 %v284, %v1272
    %v1274 = vpop.f32.mrb[0].mxu0
    %1275 = vmatprep.mubr.bf16.mxu0 0
    %1276 = vmatmul.mubr.bf16.gmra.mrb[0].mxu0 %v773
    %v1277 = vpop.f32.mrb[0].mxu0
    %v1278 = vadd.f32 %v284, %v1277
    %v1279 = vpop.f32.mrb[0].mxu0
    %v1280 = vpop.f32.mrb[0].mxu0
    %v1281 = vadd.f32 %v284, %v1280
    %v1282 = vpop.f32.mrb[0].mxu0
    %1283 = vmatprep.mubr.bf16.mxu0 0
    %1284 = vmatmul.mubr.bf16.gmra.mrb[0].mxu0 %v776
    %v1285 = vpop.f32.mrb[0].mxu0
    %v1286 = vadd.f32 %v284, %v1285
    %v1287 = vpop.f32.mrb[0].mxu0
    %v1288 = vpop.f32.mrb[0].mxu0
    %v1289 = vadd.f32 %v284, %v1288
    %v1290 = vpop.f32.mrb[0].mxu0
    %1291 = vmatprep.mubr.bf16.mxu0 0
    %1292 = vmatmul.mubr.bf16.gmra.mrb[0].mxu0 %v779
    %v1293 = vpop.f32.mrb[0].mxu0
    %v1294 = vadd.f32 %v284, %v1293
    %v1295 = vpop.f32.mrb[0].mxu0
    %v1296 = vpop.f32.mrb[0].mxu0
    %v1297 = vadd.f32 %v284, %v1296
    %v1298 = vpop.f32.mrb[0].mxu0
    %1299 = vmatprep.mubr.bf16.mxu0 0
    %1300 = vmatmul.mubr.bf16.gmra.mrb[0].mxu0 %v782
    %v1301 = vpop.f32.mrb[0].mxu0
    %v1302 = vadd.f32 %v284, %v1301
    %v1303 = vpop.f32.mrb[0].mxu0
    %v1304 = vpop.f32.mrb[0].mxu0
    %v1305 = vadd.f32 %v284, %v1304
    %v1306 = vpop.f32.mrb[0].mxu0
    %1307 = vmatprep.mubr.bf16.mxu0 0
    %1308 = vmatmul.mubr.bf16.gmra.mrb[0].mxu0 %v785
    %v1309 = vpop.f32.mrb[0].mxu0
    %v1310 = vadd.f32 %v284, %v1309
    %v1311 = vpop.f32.mrb[0].mxu0
    %v1312 = vpop.f32.mrb[0].mxu0
    %v1313 = vadd.f32 %v284, %v1312
    %v1314 = vpop.f32.mrb[0].mxu0
    %1315 = vmatprep.mubr.bf16.mxu0 0
    %1316 = vmatmul.mubr.bf16.gmra.mrb[0].mxu0 %v788
    %v1317 = vpop.f32.mrb[0].mxu0
    %v1318 = vadd.f32 %v284, %v1317
    %v1319 = vpop.f32.mrb[0].mxu0
    %v1320 = vpop.f32.mrb[0].mxu0
    %v1321 = vadd.f32 %v284, %v1320
    %v1322 = vpop.f32.mrb[0].mxu0
    %1323 = vmatprep.mubr.bf16.mxu0 0
    %1324 = vmatmul.mubr.bf16.gmra.mrb[0].mxu0 %v791
    %v1325 = vpop.f32.mrb[0].mxu0
    %v1326 = vadd.f32 %v284, %v1325
    %v1327 = vpop.f32.mrb[0].mxu0
    %v1328 = vpop.f32.mrb[0].mxu0
    %v1329 = vadd.f32 %v284, %v1328
    %v1330 = vpop.f32.mrb[0].mxu0
    %1331 = vmatprep.mubr.bf16.mxu0 0
    %1332 = vmatmul.mubr.bf16.gmra.mrb[0].mxu0 %v794
    %v1333 = vpop.f32.mrb[0].mxu0
    %v1334 = vadd.f32 %v284, %v1333
    %v1335 = vpop.f32.mrb[0].mxu0
    %v1336 = vpop.f32.mrb[0].mxu0
    %v1337 = vadd.f32 %v284, %v1336
    %v1338 = vpop.f32.mrb[0].mxu0
    %1339 = vmatprep.mubr.bf16.mxu0 0
    %1340 = vmatmul.mubr.bf16.gmra.mrb[0].mxu0 %v797
    %v1341 = vpop.f32.mrb[0].mxu0
    %v1342 = vadd.f32 %v284, %v1341
    %v1343 = vpop.f32.mrb[0].mxu0
    %v1344 = vpop.f32.mrb[0].mxu0
    %v1345 = vadd.f32 %v284, %v1344
    %v1346 = vpop.f32.mrb[0].mxu0
    %1347 = vdwg.mxu0
    %v1348 = vmax.f32 %v838, 0.0
    %v1349 = vmax.f32 %v841, 0.0
    %v1350 = vmax.f32 %v846, 0.0
    %v1351 = vmax.f32 %v849, 0.0
    %v1352 = vmax.f32 %v854, 0.0
    %v1353 = vmax.f32 %v857, 0.0
    %v1354 = vmax.f32 %v862, 0.0
    %v1355 = vmax.f32 %v865, 0.0
    %v1356 = vmax.f32 %v870, 0.0
    %v1357 = vmax.f32 %v873, 0.0
    %v1358 = vmax.f32 %v878, 0.0
    %v1359 = vmax.f32 %v881, 0.0
    %v1360 = vmax.f32 %v886, 0.0
    %v1361 = vmax.f32 %v889, 0.0
    %v1362 = vmax.f32 %v894, 0.0
    %v1363 = vmax.f32 %v897, 0.0
    %v1364 = vmax.f32 %v902, 0.0
    %v1365 = vmax.f32 %v905, 0.0
    %v1366 = vmax.f32 %v910, 0.0
    %v1367 = vmax.f32 %v913, 0.0
    %v1368 = vmax.f32 %v918, 0.0
    %v1369 = vmax.f32 %v921, 0.0
    %v1370 = vmax.f32 %v926, 0.0
    %v1371 = vmax.f32 %v929, 0.0
    %v1372 = vmax.f32 %v934, 0.0
    %v1373 = vmax.f32 %v937, 0.0
    %v1374 = vmax.f32 %v942, 0.0
    %v1375 = vmax.f32 %v945, 0.0
    %v1376 = vmax.f32 %v950, 0.0
    %v1377 = vmax.f32 %v953, 0.0
    %v1378 = vmax.f32 %v958, 0.0
    %v1379 = vmax.f32 %v961, 0.0
    %v1380 = vmax.f32 %v966, 0.0
    %v1381 = vmax.f32 %v969, 0.0
    %v1382 = vmax.f32 %v974, 0.0
    %v1383 = vmax.f32 %v977, 0.0
    %v1384 = vmax.f32 %v982, 0.0
    %v1385 = vmax.f32 %v985, 0.0
    %v1386 = vmax.f32 %v990, 0.0
    %v1387 = vmax.f32 %v993, 0.0
    %v1388 = vmax.f32 %v998, 0.0
    %v1389 = vmax.f32 %v1001, 0.0
    %v1390 = vmax.f32 %v1006, 0.0
    %v1391 = vmax.f32 %v1009, 0.0
    %v1392 = vmax.f32 %v1014, 0.0
    %v1393 = vmax.f32 %v1017, 0.0
    %v1394 = vmax.f32 %v1022, 0.0
    %v1395 = vmax.f32 %v1025, 0.0
    %v1396 = vmax.f32 %v1030, 0.0
    %v1397 = vmax.f32 %v1033, 0.0
    %v1398 = vmax.f32 %v1038, 0.0
    %v1399 = vmax.f32 %v1041, 0.0
    %v1400 = vmax.f32 %v1046, 0.0
    %v1401 = vmax.f32 %v1049, 0.0
    %v1402 = vmax.f32 %v1054, 0.0
    %v1403 = vmax.f32 %v1057, 0.0
    %v1404 = vmax.f32 %v1062, 0.0
    %v1405 = vmax.f32 %v1065, 0.0
    %v1406 = vmax.f32 %v1070, 0.0
    %v1407 = vmax.f32 %v1073, 0.0
    %v1408 = vmax.f32 %v1078, 0.0
    %v1409 = vmax.f32 %v1081, 0.0
    %v1410 = vmax.f32 %v1086, 0.0
    %v1411 = vmax.f32 %v1089, 0.0
    %v1412 = vmax.f32 %v1094, 0.0
    %v1413 = vmax.f32 %v1097, 0.0
    %v1414 = vmax.f32 %v1102, 0.0
    %v1415 = vmax.f32 %v1105, 0.0
    %v1416 = vmax.f32 %v1110, 0.0
    %v1417 = vmax.f32 %v1113, 0.0
    %v1418 = vmax.f32 %v1118, 0.0
    %v1419 = vmax.f32 %v1121, 0.0
    %v1420 = vmax.f32 %v1126, 0.0
    %v1421 = vmax.f32 %v1129, 0.0
    %v1422 = vmax.f32 %v1134, 0.0
    %v1423 = vmax.f32 %v1137, 0.0
    %v1424 = vmax.f32 %v1142, 0.0
    %v1425 = vmax.f32 %v1145, 0.0
    %v1426 = vmax.f32 %v1150, 0.0
    %v1427 = vmax.f32 %v1153, 0.0
    %v1428 = vmax.f32 %v1158, 0.0
    %v1429 = vmax.f32 %v1161, 0.0
    %v1430 = vmax.f32 %v1166, 0.0
    %v1431 = vmax.f32 %v1169, 0.0
    %v1432 = vmax.f32 %v1174, 0.0
    %v1433 = vmax.f32 %v1177, 0.0
    %v1434 = vmax.f32 %v1182, 0.0
    %v1435 = vmax.f32 %v1185, 0.0
    %v1436 = vmax.f32 %v1190, 0.0
    %v1437 = vmax.f32 %v1193, 0.0
    %v1438 = vmax.f32 %v1198, 0.0
    %v1439 = vmax.f32 %v1201, 0.0
    %v1440 = vmax.f32 %v1206, 0.0
    %v1441 = vmax.f32 %v1209, 0.0
    %v1442 = vmax.f32 %v1214, 0.0
    %v1443 = vmax.f32 %v1217, 0.0
    %v1444 = vmax.f32 %v1222, 0.0
    %v1445 = vmax.f32 %v1225, 0.0
    %v1446 = vmax.f32 %v1230, 0.0
    %v1447 = vmax.f32 %v1233, 0.0
    %v1448 = vmax.f32 %v1238, 0.0
    %v1449 = vmax.f32 %v1241, 0.0
    %v1450 = vmax.f32 %v1246, 0.0
    %v1451 = vmax.f32 %v1249, 0.0
    %v1452 = vmax.f32 %v1254, 0.0
    %v1453 = vmax.f32 %v1257, 0.0
    %v1454 = vmax.f32 %v1262, 0.0
    %v1455 = vmax.f32 %v1265, 0.0
    %v1456 = vmax.f32 %v1270, 0.0
    %v1457 = vmax.f32 %v1273, 0.0
    %v1458 = vmax.f32 %v1278, 0.0
    %v1459 = vmax.f32 %v1281, 0.0
    %v1460 = vmax.f32 %v1286, 0.0
    %v1461 = vmax.f32 %v1289, 0.0
    %v1462 = vmax.f32 %v1294, 0.0
    %v1463 = vmax.f32 %v1297, 0.0
    %v1464 = vmax.f32 %v1302, 0.0
    %v1465 = vmax.f32 %v1305, 0.0
    %v1466 = vmax.f32 %v1310, 0.0
    %v1467 = vmax.f32 %v1313, 0.0
    %v1468 = vmax.f32 %v1318, 0.0
    %v1469 = vmax.f32 %v1321, 0.0
    %v1470 = vmax.f32 %v1326, 0.0
    %v1471 = vmax.f32 %v1329, 0.0
    %v1472 = vmax.f32 %v1334, 0.0
    %v1473 = vmax.f32 %v1337, 0.0
    %v1474 = vmax.f32 %v1342, 0.0
    %v1475 = vmax.f32 %v1345, 0.0
    %v1476 = vpack.c.bf16 %v1349, %v1348
    %v1477 = vpack.c.bf16 %v1351, %v1350
    %v1478 = vpack.c.bf16 %v1353, %v1352
    %v1479 = vpack.c.bf16 %v1355, %v1354
    %v1480 = vpack.c.bf16 %v1357, %v1356
    %v1481 = vpack.c.bf16 %v1359, %v1358
    %v1482 = vpack.c.bf16 %v1361, %v1360
    %v1483 = vpack.c.bf16 %v1363, %v1362
    %v1484 = vpack.c.bf16 %v1365, %v1364
    %v1485 = vpack.c.bf16 %v1367, %v1366
    %v1486 = vpack.c.bf16 %v1369, %v1368
    %v1487 = vpack.c.bf16 %v1371, %v1370
    %v1488 = vpack.c.bf16 %v1373, %v1372
    %v1489 = vpack.c.bf16 %v1375, %v1374
    %v1490 = vpack.c.bf16 %v1377, %v1376
    %v1491 = vpack.c.bf16 %v1379, %v1378
    %v1492 = vpack.c.bf16 %v1381, %v1380
    %v1493 = vpack.c.bf16 %v1383, %v1382
    %v1494 = vpack.c.bf16 %v1385, %v1384
    %v1495 = vpack.c.bf16 %v1387, %v1386
    %v1496 = vpack.c.bf16 %v1389, %v1388
    %v1497 = vpack.c.bf16 %v1391, %v1390
    %v1498 = vpack.c.bf16 %v1393, %v1392
    %v1499 = vpack.c.bf16 %v1395, %v1394
    %v1500 = vpack.c.bf16 %v1397, %v1396
    %v1501 = vpack.c.bf16 %v1399, %v1398
    %v1502 = vpack.c.bf16 %v1401, %v1400
    %v1503 = vpack.c.bf16 %v1403, %v1402
    %v1504 = vpack.c.bf16 %v1405, %v1404
    %v1505 = vpack.c.bf16 %v1407, %v1406
    %v1506 = vpack.c.bf16 %v1409, %v1408
    %v1507 = vpack.c.bf16 %v1411, %v1410
    %v1508 = vpack.c.bf16 %v1413, %v1412
    %v1509 = vpack.c.bf16 %v1415, %v1414
    %v1510 = vpack.c.bf16 %v1417, %v1416
    %v1511 = vpack.c.bf16 %v1419, %v1418
    %v1512 = vpack.c.bf16 %v1421, %v1420
    %v1513 = vpack.c.bf16 %v1423, %v1422
    %v1514 = vpack.c.bf16 %v1425, %v1424
    %v1515 = vpack.c.bf16 %v1427, %v1426
    %v1516 = vpack.c.bf16 %v1429, %v1428
    %v1517 = vpack.c.bf16 %v1431, %v1430
    %v1518 = vpack.c.bf16 %v1433, %v1432
    %v1519 = vpack.c.bf16 %v1435, %v1434
    %v1520 = vpack.c.bf16 %v1437, %v1436
    %v1521 = vpack.c.bf16 %v1439, %v1438
    %v1522 = vpack.c.bf16 %v1441, %v1440
    %v1523 = vpack.c.bf16 %v1443, %v1442
    %v1524 = vpack.c.bf16 %v1445, %v1444
    %v1525 = vpack.c.bf16 %v1447, %v1446
    %v1526 = vpack.c.bf16 %v1449, %v1448
    %v1527 = vpack.c.bf16 %v1451, %v1450
    %v1528 = vpack.c.bf16 %v1453, %v1452
    %v1529 = vpack.c.bf16 %v1455, %v1454
    %v1530 = vpack.c.bf16 %v1457, %v1456
    %v1531 = vpack.c.bf16 %v1459, %v1458
    %v1532 = vpack.c.bf16 %v1461, %v1460
    %v1533 = vpack.c.bf16 %v1463, %v1462
    %v1534 = vpack.c.bf16 %v1465, %v1464
    %v1535 = vpack.c.bf16 %v1467, %v1466
    %v1536 = vpack.c.bf16 %v1469, %v1468
    %v1537 = vpack.c.bf16 %v1471, %v1470
    %v1538 = vpack.c.bf16 %v1473, %v1472
    %v1539 = vpack.c.bf16 %v1475, %v1474
    %v1540 = vld [vmem:[%s3] sm:$0xf]
    %v1541 = vld [vmem:[%s3 + $0x4] sm:$0xf]
    %v1542 = vld [vmem:[%s3 + $0x8] sm:$0xf]
    %v1543 = vld [vmem:[%s3 + $0xc] sm:$0xf]
    %v1544 = vld [vmem:[%s3 + $0x10] sm:$0xf]
    %v1545 = vld [vmem:[%s3 + $0x14] sm:$0xf]
    %v1546 = vld [vmem:[%s3 + $0x18] sm:$0xf]
    %v1547 = vld [vmem:[%s3 + $0x1c] sm:$0xf]
    %v1548 = vld [vmem:[%s3 + $0x20] sm:$0xf]
    %v1549 = vld [vmem:[%s3 + $0x24] sm:$0xf]
    %v1550 = vld [vmem:[%s3 + $0x28] sm:$0xf]
    %v1551 = vld [vmem:[%s3 + $0x2c] sm:$0xf]
    %v1552 = vld [vmem:[%s3 + $0x30] sm:$0xf]
    %v1553 = vld [vmem:[%s3 + $0x34] sm:$0xf]
    %v1554 = vld [vmem:[%s3 + $0x38] sm:$0xf]
    %v1555 = vld [vmem:[%s3 + $0x3c] sm:$0xf]
    %v1556 = vld [vmem:[%s4] sm:$0x1]
    %v1558 = vlaneseq
    %v1559 = vshrl.u32 %v1558, 7
    %v1560 = vsub.s32 0, %v1559
    %v1561 = vrot.slane %v1556, %v1560
    %v1579 = vunpack.c.l.b16 %v1540
    %v1580 = vunpack.c.l.b16 %v1541
    %v1581 = vunpack.c.l.b16 %v1542
    %v1582 = vunpack.c.l.b16 %v1543
    %v1583 = vunpack.c.l.b16 %v1544
    %v1584 = vunpack.c.l.b16 %v1545
    %v1585 = vunpack.c.l.b16 %v1546
    %v1586 = vunpack.c.l.b16 %v1547
    %v1587 = vunpack.c.l.b16 %v1548
    %v1588 = vunpack.c.l.b16 %v1549
    %v1589 = vunpack.c.l.b16 %v1550
    %v1590 = vunpack.c.l.b16 %v1551
    %v1591 = vunpack.c.l.b16 %v1552
    %v1592 = vunpack.c.l.b16 %v1553
    %v1593 = vunpack.c.l.b16 %v1554
    %v1594 = vunpack.c.l.b16 %v1555
    %v1595 = vpack.c.b16 %v1580, %v1579
    %v1596 = vpack.c.b16 %v1582, %v1581
    %v1597 = vpack.c.b16 %v1584, %v1583
    %v1598 = vpack.c.b16 %v1586, %v1585
    %v1599 = vpack.c.b16 %v1588, %v1587
    %v1600 = vpack.c.b16 %v1590, %v1589
    %v1601 = vpack.c.b16 %v1592, %v1591
    %v1602 = vpack.c.b16 %v1594, %v1593
    %1611 = vmatprep.subr.bf16.mxu0 0
    %1612 = vmatpush1.bf16.msra.mxu0 %v1595
    %1613 = vmatprep.subr.bf16.mxu0 0
    %1614 = vmatpush1.bf16.msra.mxu0 %v1596
    %1615 = vmatprep.subr.bf16.mxu0 0
    %1616 = vmatpush1.bf16.msra.mxu0 %v1597
    %1617 = vmatprep.subr.bf16.mxu0 0
    %1618 = vmatpush1.bf16.msra.mxu0 %v1598
    %1619 = vmatprep.subr.bf16.mxu0 0
    %1620 = vmatpush1.bf16.msra.mxu0 %v1599
    %1621 = vmatprep.subr.bf16.mxu0 0
    %1622 = vmatpush1.bf16.msra.mxu0 %v1600
    %1623 = vmatprep.subr.bf16.mxu0 0
    %1624 = vmatpush1.bf16.msra.mxu0 %v1601
    %1625 = vmatprep.subr.bf16.mxu0 0
    %1626 = vmatpush1.bf16.msra.mxu0 %v1602
    %1627 = vmatprep.subr.bf16.mxu0 0
    %1628 = vmatpush1.bf16.msra.mxu0 0
    %1629 = vmatprep.subr.bf16.mxu0 0
    %1630 = vmatpush1.bf16.msra.mxu0 0
    %1631 = vmatprep.subr.bf16.mxu0 0
    %1632 = vmatpush1.bf16.msra.mxu0 0
    %1633 = vmatprep.subr.bf16.mxu0 0
    %1634 = vmatpush1.bf16.msra.mxu0 0
    %1635 = vmatprep.subr.bf16.mxu0 0
    %1636 = vmatpush1.bf16.msra.mxu0 0
    %1637 = vmatprep.subr.bf16.mxu0 0
    %1638 = vmatpush1.bf16.msra.mxu0 0
    %1639 = vmatprep.subr.bf16.mxu0 0
    %1640 = vmatpush1.bf16.msra.mxu0 0
    %1641 = vmatprep.subr.bf16.mxu0 0
    %1642 = vmatpush1.bf16.msra.mxu0 0
    %1643 = vmatprep.mubr.bf16.mxu0 0
    %1644 = vmatmul.mubr.bf16.gmra.mrb[0].mxu0 %v1476
    %v1645 = vpop.f32.mrb[0].mxu0
    %v1646 = vadd.f32 %v1561, %v1645
    %v1647 = vpop.f32.mrb[0].mxu0
    %v1648 = vpop.f32.mrb[0].mxu0
    %v1649 = vadd.f32 %v1561, %v1648
    %v1650 = vpop.f32.mrb[0].mxu0
    %1651 = vmatprep.mubr.bf16.mxu0 0
    %1652 = vmatmul.mubr.bf16.gmra.mrb[0].mxu0 %v1477
    %v1653 = vpop.f32.mrb[0].mxu0
    %v1654 = vadd.f32 %v1561, %v1653
    %v1655 = vpop.f32.mrb[0].mxu0
    %v1656 = vpop.f32.mrb[0].mxu0
    %v1657 = vadd.f32 %v1561, %v1656
    %v1658 = vpop.f32.mrb[0].mxu0
    %1659 = vmatprep.mubr.bf16.mxu0 0
    %1660 = vmatmul.mubr.bf16.gmra.mrb[0].mxu0 %v1478
    %v1661 = vpop.f32.mrb[0].mxu0
    %v1662 = vadd.f32 %v1561, %v1661
    %v1663 = vpop.f32.mrb[0].mxu0
    %v1664 = vpop.f32.mrb[0].mxu0
    %v1665 = vadd.f32 %v1561, %v1664
    %v1666 = vpop.f32.mrb[0].mxu0
    %1667 = vmatprep.mubr.bf16.mxu0 0
    %1668 = vmatmul.mubr.bf16.gmra.mrb[0].mxu0 %v1479
    %v1669 = vpop.f32.mrb[0].mxu0
    %v1670 = vadd.f32 %v1561, %v1669
    %v1671 = vpop.f32.mrb[0].mxu0
    %v1672 = vpop.f32.mrb[0].mxu0
    %v1673 = vadd.f32 %v1561, %v1672
    %v1674 = vpop.f32.mrb[0].mxu0
    %1675 = vmatprep.mubr.bf16.mxu0 0
    %1676 = vmatmul.mubr.bf16.gmra.mrb[0].mxu0 %v1480
    %v1677 = vpop.f32.mrb[0].mxu0
    %v1678 = vadd.f32 %v1561, %v1677
    %v1679 = vpop.f32.mrb[0].mxu0
    %v1680 = vpop.f32.mrb[0].mxu0
    %v1681 = vadd.f32 %v1561, %v1680
    %v1682 = vpop.f32.mrb[0].mxu0
    %1683 = vmatprep.mubr.bf16.mxu0 0
    %1684 = vmatmul.mubr.bf16.gmra.mrb[0].mxu0 %v1481
    %v1685 = vpop.f32.mrb[0].mxu0
    %v1686 = vadd.f32 %v1561, %v1685
    %v1687 = vpop.f32.mrb[0].mxu0
    %v1688 = vpop.f32.mrb[0].mxu0
    %v1689 = vadd.f32 %v1561, %v1688
    %v1690 = vpop.f32.mrb[0].mxu0
    %1691 = vmatprep.mubr.bf16.mxu0 0
    %1692 = vmatmul.mubr.bf16.gmra.mrb[0].mxu0 %v1482
    %v1693 = vpop.f32.mrb[0].mxu0
    %v1694 = vadd.f32 %v1561, %v1693
    %v1695 = vpop.f32.mrb[0].mxu0
    %v1696 = vpop.f32.mrb[0].mxu0
    %v1697 = vadd.f32 %v1561, %v1696
    %v1698 = vpop.f32.mrb[0].mxu0
    %1699 = vmatprep.mubr.bf16.mxu0 0
    %1700 = vmatmul.mubr.bf16.gmra.mrb[0].mxu0 %v1483
    %v1701 = vpop.f32.mrb[0].mxu0
    %v1702 = vadd.f32 %v1561, %v1701
    %v1703 = vpop.f32.mrb[0].mxu0
    %v1704 = vpop.f32.mrb[0].mxu0
    %v1705 = vadd.f32 %v1561, %v1704
    %v1706 = vpop.f32.mrb[0].mxu0
    %1707 = vmatprep.mubr.bf16.mxu0 0
    %1708 = vmatmul.mubr.bf16.gmra.mrb[0].mxu0 %v1484
    %v1709 = vpop.f32.mrb[0].mxu0
    %v1710 = vadd.f32 %v1561, %v1709
    %v1711 = vpop.f32.mrb[0].mxu0
    %v1712 = vpop.f32.mrb[0].mxu0
    %v1713 = vadd.f32 %v1561, %v1712
    %v1714 = vpop.f32.mrb[0].mxu0
    %1715 = vmatprep.mubr.bf16.mxu0 0
    %1716 = vmatmul.mubr.bf16.gmra.mrb[0].mxu0 %v1485
    %v1717 = vpop.f32.mrb[0].mxu0
    %v1718 = vadd.f32 %v1561, %v1717
    %v1719 = vpop.f32.mrb[0].mxu0
    %v1720 = vpop.f32.mrb[0].mxu0
    %v1721 = vadd.f32 %v1561, %v1720
    %v1722 = vpop.f32.mrb[0].mxu0
    %1723 = vmatprep.mubr.bf16.mxu0 0
    %1724 = vmatmul.mubr.bf16.gmra.mrb[0].mxu0 %v1486
    %v1725 = vpop.f32.mrb[0].mxu0
    %v1726 = vadd.f32 %v1561, %v1725
    %v1727 = vpop.f32.mrb[0].mxu0
    %v1728 = vpop.f32.mrb[0].mxu0
    %v1729 = vadd.f32 %v1561, %v1728
    %v1730 = vpop.f32.mrb[0].mxu0
    %1731 = vmatprep.mubr.bf16.mxu0 0
    %1732 = vmatmul.mubr.bf16.gmra.mrb[0].mxu0 %v1487
    %v1733 = vpop.f32.mrb[0].mxu0
    %v1734 = vadd.f32 %v1561, %v1733
    %v1735 = vpop.f32.mrb[0].mxu0
    %v1736 = vpop.f32.mrb[0].mxu0
    %v1737 = vadd.f32 %v1561, %v1736
    %v1738 = vpop.f32.mrb[0].mxu0
    %1739 = vmatprep.mubr.bf16.mxu0 0
    %1740 = vmatmul.mubr.bf16.gmra.mrb[0].mxu0 %v1488
    %v1741 = vpop.f32.mrb[0].mxu0
    %v1742 = vadd.f32 %v1561, %v1741
    %v1743 = vpop.f32.mrb[0].mxu0
    %v1744 = vpop.f32.mrb[0].mxu0
    %v1745 = vadd.f32 %v1561, %v1744
    %v1746 = vpop.f32.mrb[0].mxu0
    %1747 = vmatprep.mubr.bf16.mxu0 0
    %1748 = vmatmul.mubr.bf16.gmra.mrb[0].mxu0 %v1489
    %v1749 = vpop.f32.mrb[0].mxu0
    %v1750 = vadd.f32 %v1561, %v1749
    %v1751 = vpop.f32.mrb[0].mxu0
    %v1752 = vpop.f32.mrb[0].mxu0
    %v1753 = vadd.f32 %v1561, %v1752
    %v1754 = vpop.f32.mrb[0].mxu0
    %1755 = vmatprep.mubr.bf16.mxu0 0
    %1756 = vmatmul.mubr.bf16.gmra.mrb[0].mxu0 %v1490
    %v1757 = vpop.f32.mrb[0].mxu0
    %v1758 = vadd.f32 %v1561, %v1757
    %v1759 = vpop.f32.mrb[0].mxu0
    %v1760 = vpop.f32.mrb[0].mxu0
    %v1761 = vadd.f32 %v1561, %v1760
    %v1762 = vpop.f32.mrb[0].mxu0
    %1763 = vmatprep.mubr.bf16.mxu0 0
    %1764 = vmatmul.mubr.bf16.gmra.mrb[0].mxu0 %v1491
    %v1765 = vpop.f32.mrb[0].mxu0
    %v1766 = vadd.f32 %v1561, %v1765
    %v1767 = vpop.f32.mrb[0].mxu0
    %v1768 = vpop.f32.mrb[0].mxu0
    %v1769 = vadd.f32 %v1561, %v1768
    %v1770 = vpop.f32.mrb[0].mxu0
    %1771 = vmatprep.mubr.bf16.mxu0 0
    %1772 = vmatmul.mubr.bf16.gmra.mrb[0].mxu0 %v1492
    %v1773 = vpop.f32.mrb[0].mxu0
    %v1774 = vadd.f32 %v1561, %v1773
    %v1775 = vpop.f32.mrb[0].mxu0
    %v1776 = vpop.f32.mrb[0].mxu0
    %v1777 = vadd.f32 %v1561, %v1776
    %v1778 = vpop.f32.mrb[0].mxu0
    %1779 = vmatprep.mubr.bf16.mxu0 0
    %1780 = vmatmul.mubr.bf16.gmra.mrb[0].mxu0 %v1493
    %v1781 = vpop.f32.mrb[0].mxu0
    %v1782 = vadd.f32 %v1561, %v1781
    %v1783 = vpop.f32.mrb[0].mxu0
    %v1784 = vpop.f32.mrb[0].mxu0
    %v1785 = vadd.f32 %v1561, %v1784
    %v1786 = vpop.f32.mrb[0].mxu0
    %1787 = vmatprep.mubr.bf16.mxu0 0
    %1788 = vmatmul.mubr.bf16.gmra.mrb[0].mxu0 %v1494
    %v1789 = vpop.f32.mrb[0].mxu0
    %v1790 = vadd.f32 %v1561, %v1789
    %v1791 = vpop.f32.mrb[0].mxu0
    %v1792 = vpop.f32.mrb[0].mxu0
    %v1793 = vadd.f32 %v1561, %v1792
    %v1794 = vpop.f32.mrb[0].mxu0
    %1795 = vmatprep.mubr.bf16.mxu0 0
    %1796 = vmatmul.mubr.bf16.gmra.mrb[0].mxu0 %v1495
    %v1797 = vpop.f32.mrb[0].mxu0
    %v1798 = vadd.f32 %v1561, %v1797
    %v1799 = vpop.f32.mrb[0].mxu0
    %v1800 = vpop.f32.mrb[0].mxu0
    %v1801 = vadd.f32 %v1561, %v1800
    %v1802 = vpop.f32.mrb[0].mxu0
    %1803 = vmatprep.mubr.bf16.mxu0 0
    %1804 = vmatmul.mubr.bf16.gmra.mrb[0].mxu0 %v1496
    %v1805 = vpop.f32.mrb[0].mxu0
    %v1806 = vadd.f32 %v1561, %v1805
    %v1807 = vpop.f32.mrb[0].mxu0
    %v1808 = vpop.f32.mrb[0].mxu0
    %v1809 = vadd.f32 %v1561, %v1808
    %v1810 = vpop.f32.mrb[0].mxu0
    %1811 = vmatprep.mubr.bf16.mxu0 0
    %1812 = vmatmul.mubr.bf16.gmra.mrb[0].mxu0 %v1497
    %v1813 = vpop.f32.mrb[0].mxu0
    %v1814 = vadd.f32 %v1561, %v1813
    %v1815 = vpop.f32.mrb[0].mxu0
    %v1816 = vpop.f32.mrb[0].mxu0
    %v1817 = vadd.f32 %v1561, %v1816
    %v1818 = vpop.f32.mrb[0].mxu0
    %1819 = vmatprep.mubr.bf16.mxu0 0
    %1820 = vmatmul.mubr.bf16.gmra.mrb[0].mxu0 %v1498
    %v1821 = vpop.f32.mrb[0].mxu0
    %v1822 = vadd.f32 %v1561, %v1821
    %v1823 = vpop.f32.mrb[0].mxu0
    %v1824 = vpop.f32.mrb[0].mxu0
    %v1825 = vadd.f32 %v1561, %v1824
    %v1826 = vpop.f32.mrb[0].mxu0
    %1827 = vmatprep.mubr.bf16.mxu0 0
    %1828 = vmatmul.mubr.bf16.gmra.mrb[0].mxu0 %v1499
    %v1829 = vpop.f32.mrb[0].mxu0
    %v1830 = vadd.f32 %v1561, %v1829
    %v1831 = vpop.f32.mrb[0].mxu0
    %v1832 = vpop.f32.mrb[0].mxu0
    %v1833 = vadd.f32 %v1561, %v1832
    %v1834 = vpop.f32.mrb[0].mxu0
    %1835 = vmatprep.mubr.bf16.mxu0 0
    %1836 = vmatmul.mubr.bf16.gmra.mrb[0].mxu0 %v1500
    %v1837 = vpop.f32.mrb[0].mxu0
    %v1838 = vadd.f32 %v1561, %v1837
    %v1839 = vpop.f32.mrb[0].mxu0
    %v1840 = vpop.f32.mrb[0].mxu0
    %v1841 = vadd.f32 %v1561, %v1840
    %v1842 = vpop.f32.mrb[0].mxu0
    %1843 = vmatprep.mubr.bf16.mxu0 0
    %1844 = vmatmul.mubr.bf16.gmra.mrb[0].mxu0 %v1501
    %v1845 = vpop.f32.mrb[0].mxu0
    %v1846 = vadd.f32 %v1561, %v1845
    %v1847 = vpop.f32.mrb[0].mxu0
    %v1848 = vpop.f32.mrb[0].mxu0
    %v1849 = vadd.f32 %v1561, %v1848
    %v1850 = vpop.f32.mrb[0].mxu0
    %1851 = vmatprep.mubr.bf16.mxu0 0
    %1852 = vmatmul.mubr.bf16.gmra.mrb[0].mxu0 %v1502
    %v1853 = vpop.f32.mrb[0].mxu0
    %v1854 = vadd.f32 %v1561, %v1853
    %v1855 = vpop.f32.mrb[0].mxu0
    %v1856 = vpop.f32.mrb[0].mxu0
    %v1857 = vadd.f32 %v1561, %v1856
    %v1858 = vpop.f32.mrb[0].mxu0
    %1859 = vmatprep.mubr.bf16.mxu0 0
    %1860 = vmatmul.mubr.bf16.gmra.mrb[0].mxu0 %v1503
    %v1861 = vpop.f32.mrb[0].mxu0
    %v1862 = vadd.f32 %v1561, %v1861
    %v1863 = vpop.f32.mrb[0].mxu0
    %v1864 = vpop.f32.mrb[0].mxu0
    %v1865 = vadd.f32 %v1561, %v1864
    %v1866 = vpop.f32.mrb[0].mxu0
    %1867 = vmatprep.mubr.bf16.mxu0 0
    %1868 = vmatmul.mubr.bf16.gmra.mrb[0].mxu0 %v1504
    %v1869 = vpop.f32.mrb[0].mxu0
    %v1870 = vadd.f32 %v1561, %v1869
    %v1871 = vpop.f32.mrb[0].mxu0
    %v1872 = vpop.f32.mrb[0].mxu0
    %v1873 = vadd.f32 %v1561, %v1872
    %v1874 = vpop.f32.mrb[0].mxu0
    %1875 = vmatprep.mubr.bf16.mxu0 0
    %1876 = vmatmul.mubr.bf16.gmra.mrb[0].mxu0 %v1505
    %v1877 = vpop.f32.mrb[0].mxu0
    %v1878 = vadd.f32 %v1561, %v1877
    %v1879 = vpop.f32.mrb[0].mxu0
    %v1880 = vpop.f32.mrb[0].mxu0
    %v1881 = vadd.f32 %v1561, %v1880
    %v1882 = vpop.f32.mrb[0].mxu0
    %1883 = vmatprep.mubr.bf16.mxu0 0
    %1884 = vmatmul.mubr.bf16.gmra.mrb[0].mxu0 %v1506
    %v1885 = vpop.f32.mrb[0].mxu0
    %v1886 = vadd.f32 %v1561, %v1885
    %v1887 = vpop.f32.mrb[0].mxu0
    %v1888 = vpop.f32.mrb[0].mxu0
    %v1889 = vadd.f32 %v1561, %v1888
    %v1890 = vpop.f32.mrb[0].mxu0
    %1891 = vmatprep.mubr.bf16.mxu0 0
    %1892 = vmatmul.mubr.bf16.gmra.mrb[0].mxu0 %v1507
    %v1893 = vpop.f32.mrb[0].mxu0
    %v1894 = vadd.f32 %v1561, %v1893
    %v1895 = vpop.f32.mrb[0].mxu0
    %v1896 = vpop.f32.mrb[0].mxu0
    %v1897 = vadd.f32 %v1561, %v1896
    %v1898 = vpop.f32.mrb[0].mxu0
    %1899 = vmatprep.mubr.bf16.mxu0 0
    %1900 = vmatmul.mubr.bf16.gmra.mrb[0].mxu0 %v1508
    %v1901 = vpop.f32.mrb[0].mxu0
    %v1902 = vadd.f32 %v1561, %v1901
    %v1903 = vpop.f32.mrb[0].mxu0
    %v1904 = vpop.f32.mrb[0].mxu0
    %v1905 = vadd.f32 %v1561, %v1904
    %v1906 = vpop.f32.mrb[0].mxu0
    %1907 = vmatprep.mubr.bf16.mxu0 0
    %1908 = vmatmul.mubr.bf16.gmra.mrb[0].mxu0 %v1509
    %v1909 = vpop.f32.mrb[0].mxu0
    %v1910 = vadd.f32 %v1561, %v1909
    %v1911 = vpop.f32.mrb[0].mxu0
    %v1912 = vpop.f32.mrb[0].mxu0
    %v1913 = vadd.f32 %v1561, %v1912
    %v1914 = vpop.f32.mrb[0].mxu0
    %1915 = vmatprep.mubr.bf16.mxu0 0
    %1916 = vmatmul.mubr.bf16.gmra.mrb[0].mxu0 %v1510
    %v1917 = vpop.f32.mrb[0].mxu0
    %v1918 = vadd.f32 %v1561, %v1917
    %v1919 = vpop.f32.mrb[0].mxu0
    %v1920 = vpop.f32.mrb[0].mxu0
    %v1921 = vadd.f32 %v1561, %v1920
    %v1922 = vpop.f32.mrb[0].mxu0
    %1923 = vmatprep.mubr.bf16.mxu0 0
    %1924 = vmatmul.mubr.bf16.gmra.mrb[0].mxu0 %v1511
    %v1925 = vpop.f32.mrb[0].mxu0
    %v1926 = vadd.f32 %v1561, %v1925
    %v1927 = vpop.f32.mrb[0].mxu0
    %v1928 = vpop.f32.mrb[0].mxu0
    %v1929 = vadd.f32 %v1561, %v1928
    %v1930 = vpop.f32.mrb[0].mxu0
    %1931 = vmatprep.mubr.bf16.mxu0 0
    %1932 = vmatmul.mubr.bf16.gmra.mrb[0].mxu0 %v1512
    %v1933 = vpop.f32.mrb[0].mxu0
    %v1934 = vadd.f32 %v1561, %v1933
    %v1935 = vpop.f32.mrb[0].mxu0
    %v1936 = vpop.f32.mrb[0].mxu0
    %v1937 = vadd.f32 %v1561, %v1936
    %v1938 = vpop.f32.mrb[0].mxu0
    %1939 = vmatprep.mubr.bf16.mxu0 0
    %1940 = vmatmul.mubr.bf16.gmra.mrb[0].mxu0 %v1513
    %v1941 = vpop.f32.mrb[0].mxu0
    %v1942 = vadd.f32 %v1561, %v1941
    %v1943 = vpop.f32.mrb[0].mxu0
    %v1944 = vpop.f32.mrb[0].mxu0
    %v1945 = vadd.f32 %v1561, %v1944
    %v1946 = vpop.f32.mrb[0].mxu0
    %1947 = vmatprep.mubr.bf16.mxu0 0
    %1948 = vmatmul.mubr.bf16.gmra.mrb[0].mxu0 %v1514
    %v1949 = vpop.f32.mrb[0].mxu0
    %v1950 = vadd.f32 %v1561, %v1949
    %v1951 = vpop.f32.mrb[0].mxu0
    %v1952 = vpop.f32.mrb[0].mxu0
    %v1953 = vadd.f32 %v1561, %v1952
    %v1954 = vpop.f32.mrb[0].mxu0
    %1955 = vmatprep.mubr.bf16.mxu0 0
    %1956 = vmatmul.mubr.bf16.gmra.mrb[0].mxu0 %v1515
    %v1957 = vpop.f32.mrb[0].mxu0
    %v1958 = vadd.f32 %v1561, %v1957
    %v1959 = vpop.f32.mrb[0].mxu0
    %v1960 = vpop.f32.mrb[0].mxu0
    %v1961 = vadd.f32 %v1561, %v1960
    %v1962 = vpop.f32.mrb[0].mxu0
    %1963 = vmatprep.mubr.bf16.mxu0 0
    %1964 = vmatmul.mubr.bf16.gmra.mrb[0].mxu0 %v1516
    %v1965 = vpop.f32.mrb[0].mxu0
    %v1966 = vadd.f32 %v1561, %v1965
    %v1967 = vpop.f32.mrb[0].mxu0
    %v1968 = vpop.f32.mrb[0].mxu0
    %v1969 = vadd.f32 %v1561, %v1968
    %v1970 = vpop.f32.mrb[0].mxu0
    %1971 = vmatprep.mubr.bf16.mxu0 0
    %1972 = vmatmul.mubr.bf16.gmra.mrb[0].mxu0 %v1517
    %v1973 = vpop.f32.mrb[0].mxu0
    %v1974 = vadd.f32 %v1561, %v1973
    %v1975 = vpop.f32.mrb[0].mxu0
    %v1976 = vpop.f32.mrb[0].mxu0
    %v1977 = vadd.f32 %v1561, %v1976
    %v1978 = vpop.f32.mrb[0].mxu0
    %1979 = vmatprep.mubr.bf16.mxu0 0
    %1980 = vmatmul.mubr.bf16.gmra.mrb[0].mxu0 %v1518
    %v1981 = vpop.f32.mrb[0].mxu0
    %v1982 = vadd.f32 %v1561, %v1981
    %v1983 = vpop.f32.mrb[0].mxu0
    %v1984 = vpop.f32.mrb[0].mxu0
    %v1985 = vadd.f32 %v1561, %v1984
    %v1986 = vpop.f32.mrb[0].mxu0
    %1987 = vmatprep.mubr.bf16.mxu0 0
    %1988 = vmatmul.mubr.bf16.gmra.mrb[0].mxu0 %v1519
    %v1989 = vpop.f32.mrb[0].mxu0
    %v1990 = vadd.f32 %v1561, %v1989
    %v1991 = vpop.f32.mrb[0].mxu0
    %v1992 = vpop.f32.mrb[0].mxu0
    %v1993 = vadd.f32 %v1561, %v1992
    %v1994 = vpop.f32.mrb[0].mxu0
    %1995 = vmatprep.mubr.bf16.mxu0 0
    %1996 = vmatmul.mubr.bf16.gmra.mrb[0].mxu0 %v1520
    %v1997 = vpop.f32.mrb[0].mxu0
    %v1998 = vadd.f32 %v1561, %v1997
    %v1999 = vpop.f32.mrb[0].mxu0
    %v2000 = vpop.f32.mrb[0].mxu0
    %v2001 = vadd.f32 %v1561, %v2000
    %v2002 = vpop.f32.mrb[0].mxu0
    %2003 = vmatprep.mubr.bf16.mxu0 0
    %2004 = vmatmul.mubr.bf16.gmra.mrb[0].mxu0 %v1521
    %v2005 = vpop.f32.mrb[0].mxu0
    %v2006 = vadd.f32 %v1561, %v2005
    %v2007 = vpop.f32.mrb[0].mxu0
    %v2008 = vpop.f32.mrb[0].mxu0
    %v2009 = vadd.f32 %v1561, %v2008
    %v2010 = vpop.f32.mrb[0].mxu0
    %2011 = vmatprep.mubr.bf16.mxu0 0
    %2012 = vmatmul.mubr.bf16.gmra.mrb[0].mxu0 %v1522
    %v2013 = vpop.f32.mrb[0].mxu0
    %v2014 = vadd.f32 %v1561, %v2013
    %v2015 = vpop.f32.mrb[0].mxu0
    %v2016 = vpop.f32.mrb[0].mxu0
    %v2017 = vadd.f32 %v1561, %v2016
    %v2018 = vpop.f32.mrb[0].mxu0
    %2019 = vmatprep.mubr.bf16.mxu0 0
    %2020 = vmatmul.mubr.bf16.gmra.mrb[0].mxu0 %v1523
    %v2021 = vpop.f32.mrb[0].mxu0
    %v2022 = vadd.f32 %v1561, %v2021
    %v2023 = vpop.f32.mrb[0].mxu0
    %v2024 = vpop.f32.mrb[0].mxu0
    %v2025 = vadd.f32 %v1561, %v2024
    %v2026 = vpop.f32.mrb[0].mxu0
    %2027 = vmatprep.mubr.bf16.mxu0 0
    %2028 = vmatmul.mubr.bf16.gmra.mrb[0].mxu0 %v1524
    %v2029 = vpop.f32.mrb[0].mxu0
    %v2030 = vadd.f32 %v1561, %v2029
    %v2031 = vpop.f32.mrb[0].mxu0
    %v2032 = vpop.f32.mrb[0].mxu0
    %v2033 = vadd.f32 %v1561, %v2032
    %v2034 = vpop.f32.mrb[0].mxu0
    %2035 = vmatprep.mubr.bf16.mxu0 0
    %2036 = vmatmul.mubr.bf16.gmra.mrb[0].mxu0 %v1525
    %v2037 = vpop.f32.mrb[0].mxu0
    %v2038 = vadd.f32 %v1561, %v2037
    %v2039 = vpop.f32.mrb[0].mxu0
    %v2040 = vpop.f32.mrb[0].mxu0
    %v2041 = vadd.f32 %v1561, %v2040
    %v2042 = vpop.f32.mrb[0].mxu0
    %2043 = vmatprep.mubr.bf16.mxu0 0
    %2044 = vmatmul.mubr.bf16.gmra.mrb[0].mxu0 %v1526
    %v2045 = vpop.f32.mrb[0].mxu0
    %v2046 = vadd.f32 %v1561, %v2045
    %v2047 = vpop.f32.mrb[0].mxu0
    %v2048 = vpop.f32.mrb[0].mxu0
    %v2049 = vadd.f32 %v1561, %v2048
    %v2050 = vpop.f32.mrb[0].mxu0
    %2051 = vmatprep.mubr.bf16.mxu0 0
    %2052 = vmatmul.mubr.bf16.gmra.mrb[0].mxu0 %v1527
    %v2053 = vpop.f32.mrb[0].mxu0
    %v2054 = vadd.f32 %v1561, %v2053
    %v2055 = vpop.f32.mrb[0].mxu0
    %v2056 = vpop.f32.mrb[0].mxu0
    %v2057 = vadd.f32 %v1561, %v2056
    %v2058 = vpop.f32.mrb[0].mxu0
    %2059 = vmatprep.mubr.bf16.mxu0 0
    %2060 = vmatmul.mubr.bf16.gmra.mrb[0].mxu0 %v1528
    %v2061 = vpop.f32.mrb[0].mxu0
    %v2062 = vadd.f32 %v1561, %v2061
    %v2063 = vpop.f32.mrb[0].mxu0
    %v2064 = vpop.f32.mrb[0].mxu0
    %v2065 = vadd.f32 %v1561, %v2064
    %v2066 = vpop.f32.mrb[0].mxu0
    %2067 = vmatprep.mubr.bf16.mxu0 0
    %2068 = vmatmul.mubr.bf16.gmra.mrb[0].mxu0 %v1529
    %v2069 = vpop.f32.mrb[0].mxu0
    %v2070 = vadd.f32 %v1561, %v2069
    %v2071 = vpop.f32.mrb[0].mxu0
    %v2072 = vpop.f32.mrb[0].mxu0
    %v2073 = vadd.f32 %v1561, %v2072
    %v2074 = vpop.f32.mrb[0].mxu0
    %2075 = vmatprep.mubr.bf16.mxu0 0
    %2076 = vmatmul.mubr.bf16.gmra.mrb[0].mxu0 %v1530
    %v2077 = vpop.f32.mrb[0].mxu0
    %v2078 = vadd.f32 %v1561, %v2077
    %v2079 = vpop.f32.mrb[0].mxu0
    %v2080 = vpop.f32.mrb[0].mxu0
    %v2081 = vadd.f32 %v1561, %v2080
    %v2082 = vpop.f32.mrb[0].mxu0
    %2083 = vmatprep.mubr.bf16.mxu0 0
    %2084 = vmatmul.mubr.bf16.gmra.mrb[0].mxu0 %v1531
    %v2085 = vpop.f32.mrb[0].mxu0
    %v2086 = vadd.f32 %v1561, %v2085
    %v2087 = vpop.f32.mrb[0].mxu0
    %v2088 = vpop.f32.mrb[0].mxu0
    %v2089 = vadd.f32 %v1561, %v2088
    %v2090 = vpop.f32.mrb[0].mxu0
    %2091 = vmatprep.mubr.bf16.mxu0 0
    %2092 = vmatmul.mubr.bf16.gmra.mrb[0].mxu0 %v1532
    %v2093 = vpop.f32.mrb[0].mxu0
    %v2094 = vadd.f32 %v1561, %v2093
    %v2095 = vpop.f32.mrb[0].mxu0
    %v2096 = vpop.f32.mrb[0].mxu0
    %v2097 = vadd.f32 %v1561, %v2096
    %v2098 = vpop.f32.mrb[0].mxu0
    %2099 = vmatprep.mubr.bf16.mxu0 0
    %2100 = vmatmul.mubr.bf16.gmra.mrb[0].mxu0 %v1533
    %v2101 = vpop.f32.mrb[0].mxu0
    %v2102 = vadd.f32 %v1561, %v2101
    %v2103 = vpop.f32.mrb[0].mxu0
    %v2104 = vpop.f32.mrb[0].mxu0
    %v2105 = vadd.f32 %v1561, %v2104
    %v2106 = vpop.f32.mrb[0].mxu0
    %2107 = vmatprep.mubr.bf16.mxu0 0
    %2108 = vmatmul.mubr.bf16.gmra.mrb[0].mxu0 %v1534
    %v2109 = vpop.f32.mrb[0].mxu0
    %v2110 = vadd.f32 %v1561, %v2109
    %v2111 = vpop.f32.mrb[0].mxu0
    %v2112 = vpop.f32.mrb[0].mxu0
    %v2113 = vadd.f32 %v1561, %v2112
    %v2114 = vpop.f32.mrb[0].mxu0
    %2115 = vmatprep.mubr.bf16.mxu0 0
    %2116 = vmatmul.mubr.bf16.gmra.mrb[0].mxu0 %v1535
    %v2117 = vpop.f32.mrb[0].mxu0
    %v2118 = vadd.f32 %v1561, %v2117
    %v2119 = vpop.f32.mrb[0].mxu0
    %v2120 = vpop.f32.mrb[0].mxu0
    %v2121 = vadd.f32 %v1561, %v2120
    %v2122 = vpop.f32.mrb[0].mxu0
    %2123 = vmatprep.mubr.bf16.mxu0 0
    %2124 = vmatmul.mubr.bf16.gmra.mrb[0].mxu0 %v1536
    %v2125 = vpop.f32.mrb[0].mxu0
    %v2126 = vadd.f32 %v1561, %v2125
    %v2127 = vpop.f32.mrb[0].mxu0
    %v2128 = vpop.f32.mrb[0].mxu0
    %v2129 = vadd.f32 %v1561, %v2128
    %v2130 = vpop.f32.mrb[0].mxu0
    %2131 = vmatprep.mubr.bf16.mxu0 0
    %2132 = vmatmul.mubr.bf16.gmra.mrb[0].mxu0 %v1537
    %v2133 = vpop.f32.mrb[0].mxu0
    %v2134 = vadd.f32 %v1561, %v2133
    %v2135 = vpop.f32.mrb[0].mxu0
    %v2136 = vpop.f32.mrb[0].mxu0
    %v2137 = vadd.f32 %v1561, %v2136
    %v2138 = vpop.f32.mrb[0].mxu0
    %2139 = vmatprep.mubr.bf16.mxu0 0
    %2140 = vmatmul.mubr.bf16.gmra.mrb[0].mxu0 %v1538
    %v2141 = vpop.f32.mrb[0].mxu0
    %v2142 = vadd.f32 %v1561, %v2141
    %v2143 = vpop.f32.mrb[0].mxu0
    %v2144 = vpop.f32.mrb[0].mxu0
    %v2145 = vadd.f32 %v1561, %v2144
    %v2146 = vpop.f32.mrb[0].mxu0
    %2147 = vmatprep.mubr.bf16.mxu0 0
    %2148 = vmatmul.mubr.bf16.gmra.mrb[0].mxu0 %v1539
    %v2149 = vpop.f32.mrb[0].mxu0
    %v2150 = vadd.f32 %v1561, %v2149
    %v2151 = vpop.f32.mrb[0].mxu0
    %v2152 = vpop.f32.mrb[0].mxu0
    %v2153 = vadd.f32 %v1561, %v2152
    %v2154 = vpop.f32.mrb[0].mxu0
    %2155 = vdwg.mxu0
    %v2156 = vmax.f32 %v1646, 0.0
    %v2157 = vmax.f32 %v1649, 0.0
    %v2158 = vmax.f32 %v1654, 0.0
    %v2159 = vmax.f32 %v1657, 0.0
    %v2160 = vmax.f32 %v1662, 0.0
    %v2161 = vmax.f32 %v1665, 0.0
    %v2162 = vmax.f32 %v1670, 0.0
    %v2163 = vmax.f32 %v1673, 0.0
    %v2164 = vmax.f32 %v1678, 0.0
    %v2165 = vmax.f32 %v1681, 0.0
    %v2166 = vmax.f32 %v1686, 0.0
    %v2167 = vmax.f32 %v1689, 0.0
    %v2168 = vmax.f32 %v1694, 0.0
    %v2169 = vmax.f32 %v1697, 0.0
    %v2170 = vmax.f32 %v1702, 0.0
    %v2171 = vmax.f32 %v1705, 0.0
    %v2172 = vmax.f32 %v1710, 0.0
    %v2173 = vmax.f32 %v1713, 0.0
    %v2174 = vmax.f32 %v1718, 0.0
    %v2175 = vmax.f32 %v1721, 0.0
    %v2176 = vmax.f32 %v1726, 0.0
    %v2177 = vmax.f32 %v1729, 0.0
    %v2178 = vmax.f32 %v1734, 0.0
    %v2179 = vmax.f32 %v1737, 0.0
    %v2180 = vmax.f32 %v1742, 0.0
    %v2181 = vmax.f32 %v1745, 0.0
    %v2182 = vmax.f32 %v1750, 0.0
    %v2183 = vmax.f32 %v1753, 0.0
    %v2184 = vmax.f32 %v1758, 0.0
    %v2185 = vmax.f32 %v1761, 0.0
    %v2186 = vmax.f32 %v1766, 0.0
    %v2187 = vmax.f32 %v1769, 0.0
    %v2188 = vmax.f32 %v1774, 0.0
    %v2189 = vmax.f32 %v1777, 0.0
    %v2190 = vmax.f32 %v1782, 0.0
    %v2191 = vmax.f32 %v1785, 0.0
    %v2192 = vmax.f32 %v1790, 0.0
    %v2193 = vmax.f32 %v1793, 0.0
    %v2194 = vmax.f32 %v1798, 0.0
    %v2195 = vmax.f32 %v1801, 0.0
    %v2196 = vmax.f32 %v1806, 0.0
    %v2197 = vmax.f32 %v1809, 0.0
    %v2198 = vmax.f32 %v1814, 0.0
    %v2199 = vmax.f32 %v1817, 0.0
    %v2200 = vmax.f32 %v1822, 0.0
    %v2201 = vmax.f32 %v1825, 0.0
    %v2202 = vmax.f32 %v1830, 0.0
    %v2203 = vmax.f32 %v1833, 0.0
    %v2204 = vmax.f32 %v1838, 0.0
    %v2205 = vmax.f32 %v1841, 0.0
    %v2206 = vmax.f32 %v1846, 0.0
    %v2207 = vmax.f32 %v1849, 0.0
    %v2208 = vmax.f32 %v1854, 0.0
    %v2209 = vmax.f32 %v1857, 0.0
    %v2210 = vmax.f32 %v1862, 0.0
    %v2211 = vmax.f32 %v1865, 0.0
    %v2212 = vmax.f32 %v1870, 0.0
    %v2213 = vmax.f32 %v1873, 0.0
    %v2214 = vmax.f32 %v1878, 0.0
    %v2215 = vmax.f32 %v1881, 0.0
    %v2216 = vmax.f32 %v1886, 0.0
    %v2217 = vmax.f32 %v1889, 0.0
    %v2218 = vmax.f32 %v1894, 0.0
    %v2219 = vmax.f32 %v1897, 0.0
    %v2220 = vmax.f32 %v1902, 0.0
    %v2221 = vmax.f32 %v1905, 0.0
    %v2222 = vmax.f32 %v1910, 0.0
    %v2223 = vmax.f32 %v1913, 0.0
    %v2224 = vmax.f32 %v1918, 0.0
    %v2225 = vmax.f32 %v1921, 0.0
    %v2226 = vmax.f32 %v1926, 0.0
    %v2227 = vmax.f32 %v1929, 0.0
    %v2228 = vmax.f32 %v1934, 0.0
    %v2229 = vmax.f32 %v1937, 0.0
    %v2230 = vmax.f32 %v1942, 0.0
    %v2231 = vmax.f32 %v1945, 0.0
    %v2232 = vmax.f32 %v1950, 0.0
    %v2233 = vmax.f32 %v1953, 0.0
    %v2234 = vmax.f32 %v1958, 0.0
    %v2235 = vmax.f32 %v1961, 0.0
    %v2236 = vmax.f32 %v1966, 0.0
    %v2237 = vmax.f32 %v1969, 0.0
    %v2238 = vmax.f32 %v1974, 0.0
    %v2239 = vmax.f32 %v1977, 0.0
    %v2240 = vmax.f32 %v1982, 0.0
    %v2241 = vmax.f32 %v1985, 0.0
    %v2242 = vmax.f32 %v1990, 0.0
    %v2243 = vmax.f32 %v1993, 0.0
    %v2244 = vmax.f32 %v1998, 0.0
    %v2245 = vmax.f32 %v2001, 0.0
    %v2246 = vmax.f32 %v2006, 0.0
    %v2247 = vmax.f32 %v2009, 0.0
    %v2248 = vmax.f32 %v2014, 0.0
    %v2249 = vmax.f32 %v2017, 0.0
    %v2250 = vmax.f32 %v2022, 0.0
    %v2251 = vmax.f32 %v2025, 0.0
    %v2252 = vmax.f32 %v2030, 0.0
    %v2253 = vmax.f32 %v2033, 0.0
    %v2254 = vmax.f32 %v2038, 0.0
    %v2255 = vmax.f32 %v2041, 0.0
    %v2256 = vmax.f32 %v2046, 0.0
    %v2257 = vmax.f32 %v2049, 0.0
    %v2258 = vmax.f32 %v2054, 0.0
    %v2259 = vmax.f32 %v2057, 0.0
    %v2260 = vmax.f32 %v2062, 0.0
    %v2261 = vmax.f32 %v2065, 0.0
    %v2262 = vmax.f32 %v2070, 0.0
    %v2263 = vmax.f32 %v2073, 0.0
    %v2264 = vmax.f32 %v2078, 0.0
    %v2265 = vmax.f32 %v2081, 0.0
    %v2266 = vmax.f32 %v2086, 0.0
    %v2267 = vmax.f32 %v2089, 0.0
    %v2268 = vmax.f32 %v2094, 0.0
    %v2269 = vmax.f32 %v2097, 0.0
    %v2270 = vmax.f32 %v2102, 0.0
    %v2271 = vmax.f32 %v2105, 0.0
    %v2272 = vmax.f32 %v2110, 0.0
    %v2273 = vmax.f32 %v2113, 0.0
    %v2274 = vmax.f32 %v2118, 0.0
    %v2275 = vmax.f32 %v2121, 0.0
    %v2276 = vmax.f32 %v2126, 0.0
    %v2277 = vmax.f32 %v2129, 0.0
    %v2278 = vmax.f32 %v2134, 0.0
    %v2279 = vmax.f32 %v2137, 0.0
    %v2280 = vmax.f32 %v2142, 0.0
    %v2281 = vmax.f32 %v2145, 0.0
    %v2282 = vmax.f32 %v2150, 0.0
    %v2283 = vmax.f32 %v2153, 0.0
    %2285 = vset.pattern.permute.xlu0 7
    %2286 = vperm.xlu0 %2285, %v150
    %v2287 = vpop.permute.xlu0 %2286
    %2290 = vset.pattern.permute.xlu0 7
    %2291 = vperm.xlu0 %2290, %v151
    %v2292 = vpop.permute.xlu0 %2291
    %2295 = vset.pattern.permute.xlu0 7
    %2296 = vperm.xlu0 %2295, %v152
    %v2297 = vpop.permute.xlu0 %2296
    %2300 = vset.pattern.permute.xlu0 7
    %2301 = vperm.xlu0 %2300, %v153
    %v2302 = vpop.permute.xlu0 %2301
    %2305 = vset.pattern.permute.xlu0 7
    %2306 = vperm.xlu0 %2305, %v154
    %v2307 = vpop.permute.xlu0 %2306
    %2310 = vset.pattern.permute.xlu0 7
    %2311 = vperm.xlu0 %2310, %v155
    %v2312 = vpop.permute.xlu0 %2311
    %2315 = vset.pattern.permute.xlu0 7
    %2316 = vperm.xlu0 %2315, %v156
    %v2317 = vpop.permute.xlu0 %2316
    %2320 = vset.pattern.permute.xlu0 7
    %2321 = vperm.xlu0 %2320, %v157
    %v2322 = vpop.permute.xlu0 %2321
    %2325 = vset.pattern.permute.xlu0 7
    %2326 = vperm.xlu0 %2325, %v158
    %v2327 = vpop.permute.xlu0 %2326
    %2330 = vset.pattern.permute.xlu0 7
    %2331 = vperm.xlu0 %2330, %v159
    %v2332 = vpop.permute.xlu0 %2331
    %2335 = vset.pattern.permute.xlu0 7
    %2336 = vperm.xlu0 %2335, %v160
    %v2337 = vpop.permute.xlu0 %2336
    %2340 = vset.pattern.permute.xlu0 7
    %2341 = vperm.xlu0 %2340, %v161
    %v2342 = vpop.permute.xlu0 %2341
    %2345 = vset.pattern.permute.xlu0 7
    %2346 = vperm.xlu0 %2345, %v162
    %v2347 = vpop.permute.xlu0 %2346
    %2350 = vset.pattern.permute.xlu0 7
    %2351 = vperm.xlu0 %2350, %v163
    %v2352 = vpop.permute.xlu0 %2351
    %2355 = vset.pattern.permute.xlu0 7
    %2356 = vperm.xlu0 %2355, %v164
    %v2357 = vpop.permute.xlu0 %2356
    %2360 = vset.pattern.permute.xlu0 7
    %2361 = vperm.xlu0 %2360, %v165
    %v2362 = vpop.permute.xlu0 %2361
    %2365 = vset.pattern.permute.xlu0 7
    %2366 = vperm.xlu0 %2365, %v166
    %v2367 = vpop.permute.xlu0 %2366
    %2370 = vset.pattern.permute.xlu0 7
    %2371 = vperm.xlu0 %2370, %v167
    %v2372 = vpop.permute.xlu0 %2371
    %2375 = vset.pattern.permute.xlu0 7
    %2376 = vperm.xlu0 %2375, %v168
    %v2377 = vpop.permute.xlu0 %2376
    %2380 = vset.pattern.permute.xlu0 7
    %2381 = vperm.xlu0 %2380, %v169
    %v2382 = vpop.permute.xlu0 %2381
    %2385 = vset.pattern.permute.xlu0 7
    %2386 = vperm.xlu0 %2385, %v170
    %v2387 = vpop.permute.xlu0 %2386
    %2390 = vset.pattern.permute.xlu0 7
    %2391 = vperm.xlu0 %2390, %v171
    %v2392 = vpop.permute.xlu0 %2391
    %2395 = vset.pattern.permute.xlu0 7
    %2396 = vperm.xlu0 %2395, %v172
    %v2397 = vpop.permute.xlu0 %2396
    %2400 = vset.pattern.permute.xlu0 7
    %2401 = vperm.xlu0 %2400, %v173
    %v2402 = vpop.permute.xlu0 %2401
    %2405 = vset.pattern.permute.xlu0 7
    %2406 = vperm.xlu0 %2405, %v174
    %v2407 = vpop.permute.xlu0 %2406
    %2410 = vset.pattern.permute.xlu0 7
    %2411 = vperm.xlu0 %2410, %v175
    %v2412 = vpop.permute.xlu0 %2411
    %2415 = vset.pattern.permute.xlu0 7
    %2416 = vperm.xlu0 %2415, %v176
    %v2417 = vpop.permute.xlu0 %2416
    %2420 = vset.pattern.permute.xlu0 7
    %2421 = vperm.xlu0 %2420, %v177
    %v2422 = vpop.permute.xlu0 %2421
    %2425 = vset.pattern.permute.xlu0 7
    %2426 = vperm.xlu0 %2425, %v178
    %v2427 = vpop.permute.xlu0 %2426
    %2430 = vset.pattern.permute.xlu0 7
    %2431 = vperm.xlu0 %2430, %v179
    %v2432 = vpop.permute.xlu0 %2431
    %2435 = vset.pattern.permute.xlu0 7
    %2436 = vperm.xlu0 %2435, %v180
    %v2437 = vpop.permute.xlu0 %2436
    %2440 = vset.pattern.permute.xlu0 7
    %2441 = vperm.xlu0 %2440, %v181
    %v2442 = vpop.permute.xlu0 %2441
    %2445 = vset.pattern.permute.xlu0 7
    %2446 = vperm.xlu0 %2445, %v182
    %v2447 = vpop.permute.xlu0 %2446
    %2450 = vset.pattern.permute.xlu0 7
    %2451 = vperm.xlu0 %2450, %v183
    %v2452 = vpop.permute.xlu0 %2451
    %2455 = vset.pattern.permute.xlu0 7
    %2456 = vperm.xlu0 %2455, %v184
    %v2457 = vpop.permute.xlu0 %2456
    %2460 = vset.pattern.permute.xlu0 7
    %2461 = vperm.xlu0 %2460, %v185
    %v2462 = vpop.permute.xlu0 %2461
    %2465 = vset.pattern.permute.xlu0 7
    %2466 = vperm.xlu0 %2465, %v186
    %v2467 = vpop.permute.xlu0 %2466
    %2470 = vset.pattern.permute.xlu0 7
    %2471 = vperm.xlu0 %2470, %v187
    %v2472 = vpop.permute.xlu0 %2471
    %2475 = vset.pattern.permute.xlu0 7
    %2476 = vperm.xlu0 %2475, %v188
    %v2477 = vpop.permute.xlu0 %2476
    %2480 = vset.pattern.permute.xlu0 7
    %2481 = vperm.xlu0 %2480, %v189
    %v2482 = vpop.permute.xlu0 %2481
    %2485 = vset.pattern.permute.xlu0 7
    %2486 = vperm.xlu0 %2485, %v190
    %v2487 = vpop.permute.xlu0 %2486
    %2490 = vset.pattern.permute.xlu0 7
    %2491 = vperm.xlu0 %2490, %v191
    %v2492 = vpop.permute.xlu0 %2491
    %2495 = vset.pattern.permute.xlu0 7
    %2496 = vperm.xlu0 %2495, %v192
    %v2497 = vpop.permute.xlu0 %2496
    %2500 = vset.pattern.permute.xlu0 7
    %2501 = vperm.xlu0 %2500, %v193
    %v2502 = vpop.permute.xlu0 %2501
    %2505 = vset.pattern.permute.xlu0 7
    %2506 = vperm.xlu0 %2505, %v194
    %v2507 = vpop.permute.xlu0 %2506
    %2510 = vset.pattern.permute.xlu0 7
    %2511 = vperm.xlu0 %2510, %v195
    %v2512 = vpop.permute.xlu0 %2511
    %2515 = vset.pattern.permute.xlu0 7
    %2516 = vperm.xlu0 %2515, %v196
    %v2517 = vpop.permute.xlu0 %2516
    %2520 = vset.pattern.permute.xlu0 7
    %2521 = vperm.xlu0 %2520, %v197
    %v2522 = vpop.permute.xlu0 %2521
    %2525 = vset.pattern.permute.xlu0 7
    %2526 = vperm.xlu0 %2525, %v198
    %v2527 = vpop.permute.xlu0 %2526
    %2530 = vset.pattern.permute.xlu0 7
    %2531 = vperm.xlu0 %2530, %v199
    %v2532 = vpop.permute.xlu0 %2531
    %2535 = vset.pattern.permute.xlu0 7
    %2536 = vperm.xlu0 %2535, %v200
    %v2537 = vpop.permute.xlu0 %2536
    %2540 = vset.pattern.permute.xlu0 7
    %2541 = vperm.xlu0 %2540, %v201
    %v2542 = vpop.permute.xlu0 %2541
    %2545 = vset.pattern.permute.xlu0 7
    %2546 = vperm.xlu0 %2545, %v202
    %v2547 = vpop.permute.xlu0 %2546
    %2550 = vset.pattern.permute.xlu0 7
    %2551 = vperm.xlu0 %2550, %v203
    %v2552 = vpop.permute.xlu0 %2551
    %2555 = vset.pattern.permute.xlu0 7
    %2556 = vperm.xlu0 %2555, %v204
    %v2557 = vpop.permute.xlu0 %2556
    %2560 = vset.pattern.permute.xlu0 7
    %2561 = vperm.xlu0 %2560, %v205
    %v2562 = vpop.permute.xlu0 %2561
    %2565 = vset.pattern.permute.xlu0 7
    %2566 = vperm.xlu0 %2565, %v206
    %v2567 = vpop.permute.xlu0 %2566
    %2570 = vset.pattern.permute.xlu0 7
    %2571 = vperm.xlu0 %2570, %v207
    %v2572 = vpop.permute.xlu0 %2571
    %2575 = vset.pattern.permute.xlu0 7
    %2576 = vperm.xlu0 %2575, %v208
    %v2577 = vpop.permute.xlu0 %2576
    %2580 = vset.pattern.permute.xlu0 7
    %2581 = vperm.xlu0 %2580, %v209
    %v2582 = vpop.permute.xlu0 %2581
    %2585 = vset.pattern.permute.xlu0 7
    %2586 = vperm.xlu0 %2585, %v210
    %v2587 = vpop.permute.xlu0 %2586
    %2590 = vset.pattern.permute.xlu0 7
    %2591 = vperm.xlu0 %2590, %v211
    %v2592 = vpop.permute.xlu0 %2591
    %2595 = vset.pattern.permute.xlu0 7
    %2596 = vperm.xlu0 %2595, %v212
    %v2597 = vpop.permute.xlu0 %2596
    %2600 = vset.pattern.permute.xlu0 7
    %2601 = vperm.xlu0 %2600, %v213
    %v2602 = vpop.permute.xlu0 %2601
    %2605 = vset.pattern.permute.xlu0 7
    %2606 = vperm.xlu0 %2605, %v214
    %v2607 = vpop.permute.xlu0 %2606
    %2610 = vset.pattern.permute.xlu0 7
    %2611 = vperm.xlu0 %2610, %v215
    %v2612 = vpop.permute.xlu0 %2611
    %2615 = vset.pattern.permute.xlu0 7
    %2616 = vperm.xlu0 %2615, %v216
    %v2617 = vpop.permute.xlu0 %2616
    %2620 = vset.pattern.permute.xlu0 7
    %2621 = vperm.xlu0 %2620, %v217
    %v2622 = vpop.permute.xlu0 %2621
    %2625 = vset.pattern.permute.xlu0 7
    %2626 = vperm.xlu0 %2625, %v218
    %v2627 = vpop.permute.xlu0 %2626
    %2630 = vset.pattern.permute.xlu0 7
    %2631 = vperm.xlu0 %2630, %v219
    %v2632 = vpop.permute.xlu0 %2631
    %2635 = vset.pattern.permute.xlu0 7
    %2636 = vperm.xlu0 %2635, %v220
    %v2637 = vpop.permute.xlu0 %2636
    %2640 = vset.pattern.permute.xlu0 7
    %2641 = vperm.xlu0 %2640, %v221
    %v2642 = vpop.permute.xlu0 %2641
    %2645 = vset.pattern.permute.xlu0 7
    %2646 = vperm.xlu0 %2645, %v222
    %v2647 = vpop.permute.xlu0 %2646
    %2650 = vset.pattern.permute.xlu0 7
    %2651 = vperm.xlu0 %2650, %v223
    %v2652 = vpop.permute.xlu0 %2651
    %2655 = vset.pattern.permute.xlu0 7
    %2656 = vperm.xlu0 %2655, %v224
    %v2657 = vpop.permute.xlu0 %2656
    %2660 = vset.pattern.permute.xlu0 7
    %2661 = vperm.xlu0 %2660, %v225
    %v2662 = vpop.permute.xlu0 %2661
    %2665 = vset.pattern.permute.xlu0 7
    %2666 = vperm.xlu0 %2665, %v226
    %v2667 = vpop.permute.xlu0 %2666
    %2670 = vset.pattern.permute.xlu0 7
    %2671 = vperm.xlu0 %2670, %v227
    %v2672 = vpop.permute.xlu0 %2671
    %2675 = vset.pattern.permute.xlu0 7
    %2676 = vperm.xlu0 %2675, %v228
    %v2677 = vpop.permute.xlu0 %2676
    %2680 = vset.pattern.permute.xlu0 7
    %2681 = vperm.xlu0 %2680, %v229
    %v2682 = vpop.permute.xlu0 %2681
    %2685 = vset.pattern.permute.xlu0 7
    %2686 = vperm.xlu0 %2685, %v230
    %v2687 = vpop.permute.xlu0 %2686
    %2690 = vset.pattern.permute.xlu0 7
    %2691 = vperm.xlu0 %2690, %v231
    %v2692 = vpop.permute.xlu0 %2691
    %2695 = vset.pattern.permute.xlu0 7
    %2696 = vperm.xlu0 %2695, %v232
    %v2697 = vpop.permute.xlu0 %2696
    %2700 = vset.pattern.permute.xlu0 7
    %2701 = vperm.xlu0 %2700, %v233
    %v2702 = vpop.permute.xlu0 %2701
    %2705 = vset.pattern.permute.xlu0 7
    %2706 = vperm.xlu0 %2705, %v234
    %v2707 = vpop.permute.xlu0 %2706
    %2710 = vset.pattern.permute.xlu0 7
    %2711 = vperm.xlu0 %2710, %v235
    %v2712 = vpop.permute.xlu0 %2711
    %2715 = vset.pattern.permute.xlu0 7
    %2716 = vperm.xlu0 %2715, %v236
    %v2717 = vpop.permute.xlu0 %2716
    %2720 = vset.pattern.permute.xlu0 7
    %2721 = vperm.xlu0 %2720, %v237
    %v2722 = vpop.permute.xlu0 %2721
    %2725 = vset.pattern.permute.xlu0 7
    %2726 = vperm.xlu0 %2725, %v238
    %v2727 = vpop.permute.xlu0 %2726
    %2730 = vset.pattern.permute.xlu0 7
    %2731 = vperm.xlu0 %2730, %v239
    %v2732 = vpop.permute.xlu0 %2731
    %2735 = vset.pattern.permute.xlu0 7
    %2736 = vperm.xlu0 %2735, %v240
    %v2737 = vpop.permute.xlu0 %2736
    %2740 = vset.pattern.permute.xlu0 7
    %2741 = vperm.xlu0 %2740, %v241
    %v2742 = vpop.permute.xlu0 %2741
    %2745 = vset.pattern.permute.xlu0 7
    %2746 = vperm.xlu0 %2745, %v242
    %v2747 = vpop.permute.xlu0 %2746
    %2750 = vset.pattern.permute.xlu0 7
    %2751 = vperm.xlu0 %2750, %v243
    %v2752 = vpop.permute.xlu0 %2751
    %2755 = vset.pattern.permute.xlu0 7
    %2756 = vperm.xlu0 %2755, %v244
    %v2757 = vpop.permute.xlu0 %2756
    %2760 = vset.pattern.permute.xlu0 7
    %2761 = vperm.xlu0 %2760, %v245
    %v2762 = vpop.permute.xlu0 %2761
    %2765 = vset.pattern.permute.xlu0 7
    %2766 = vperm.xlu0 %2765, %v246
    %v2767 = vpop.permute.xlu0 %2766
    %2770 = vset.pattern.permute.xlu0 7
    %2771 = vperm.xlu0 %2770, %v247
    %v2772 = vpop.permute.xlu0 %2771
    %2775 = vset.pattern.permute.xlu0 7
    %2776 = vperm.xlu0 %2775, %v248
    %v2777 = vpop.permute.xlu0 %2776
    %2780 = vset.pattern.permute.xlu0 7
    %2781 = vperm.xlu0 %2780, %v249
    %v2782 = vpop.permute.xlu0 %2781
    %2785 = vset.pattern.permute.xlu0 7
    %2786 = vperm.xlu0 %2785, %v250
    %v2787 = vpop.permute.xlu0 %2786
    %2790 = vset.pattern.permute.xlu0 7
    %2791 = vperm.xlu0 %2790, %v251
    %v2792 = vpop.permute.xlu0 %2791
    %2795 = vset.pattern.permute.xlu0 7
    %2796 = vperm.xlu0 %2795, %v252
    %v2797 = vpop.permute.xlu0 %2796
    %2800 = vset.pattern.permute.xlu0 7
    %2801 = vperm.xlu0 %2800, %v253
    %v2802 = vpop.permute.xlu0 %2801
    %2805 = vset.pattern.permute.xlu0 7
    %2806 = vperm.xlu0 %2805, %v254
    %v2807 = vpop.permute.xlu0 %2806
    %2810 = vset.pattern.permute.xlu0 7
    %2811 = vperm.xlu0 %2810, %v255
    %v2812 = vpop.permute.xlu0 %2811
    %2815 = vset.pattern.permute.xlu0 7
    %2816 = vperm.xlu0 %2815, %v256
    %v2817 = vpop.permute.xlu0 %2816
    %2820 = vset.pattern.permute.xlu0 7
    %2821 = vperm.xlu0 %2820, %v257
    %v2822 = vpop.permute.xlu0 %2821
    %2825 = vset.pattern.permute.xlu0 7
    %2826 = vperm.xlu0 %2825, %v258
    %v2827 = vpop.permute.xlu0 %2826
    %2830 = vset.pattern.permute.xlu0 7
    %2831 = vperm.xlu0 %2830, %v259
    %v2832 = vpop.permute.xlu0 %2831
    %2835 = vset.pattern.permute.xlu0 7
    %2836 = vperm.xlu0 %2835, %v260
    %v2837 = vpop.permute.xlu0 %2836
    %2840 = vset.pattern.permute.xlu0 7
    %2841 = vperm.xlu0 %2840, %v261
    %v2842 = vpop.permute.xlu0 %2841
    %2845 = vset.pattern.permute.xlu0 7
    %2846 = vperm.xlu0 %2845, %v262
    %v2847 = vpop.permute.xlu0 %2846
    %2850 = vset.pattern.permute.xlu0 7
    %2851 = vperm.xlu0 %2850, %v263
    %v2852 = vpop.permute.xlu0 %2851
    %2855 = vset.pattern.permute.xlu0 7
    %2856 = vperm.xlu0 %2855, %v264
    %v2857 = vpop.permute.xlu0 %2856
    %2860 = vset.pattern.permute.xlu0 7
    %2861 = vperm.xlu0 %2860, %v265
    %v2862 = vpop.permute.xlu0 %2861
    %2865 = vset.pattern.permute.xlu0 7
    %2866 = vperm.xlu0 %2865, %v266
    %v2867 = vpop.permute.xlu0 %2866
    %2870 = vset.pattern.permute.xlu0 7
    %2871 = vperm.xlu0 %2870, %v267
    %v2872 = vpop.permute.xlu0 %2871
    %2875 = vset.pattern.permute.xlu0 7
    %2876 = vperm.xlu0 %2875, %v268
    %v2877 = vpop.permute.xlu0 %2876
    %2880 = vset.pattern.permute.xlu0 7
    %2881 = vperm.xlu0 %2880, %v269
    %v2882 = vpop.permute.xlu0 %2881
    %2885 = vset.pattern.permute.xlu0 7
    %2886 = vperm.xlu0 %2885, %v270
    %v2887 = vpop.permute.xlu0 %2886
    %2890 = vset.pattern.permute.xlu0 7
    %2891 = vperm.xlu0 %2890, %v271
    %v2892 = vpop.permute.xlu0 %2891
    %2895 = vset.pattern.permute.xlu0 7
    %2896 = vperm.xlu0 %2895, %v272
    %v2897 = vpop.permute.xlu0 %2896
    %2900 = vset.pattern.permute.xlu0 7
    %2901 = vperm.xlu0 %2900, %v273
    %v2902 = vpop.permute.xlu0 %2901
    %2905 = vset.pattern.permute.xlu0 7
    %2906 = vperm.xlu0 %2905, %v274
    %v2907 = vpop.permute.xlu0 %2906
    %2910 = vset.pattern.permute.xlu0 7
    %2911 = vperm.xlu0 %2910, %v275
    %v2912 = vpop.permute.xlu0 %2911
    %2915 = vset.pattern.permute.xlu0 7
    %2916 = vperm.xlu0 %2915, %v276
    %v2917 = vpop.permute.xlu0 %2916
    %2920 = vset.pattern.permute.xlu0 7
    %2921 = vperm.xlu0 %2920, %v277
    %v2922 = vpop.permute.xlu0 %2921
    %v2924 = vmul.f32 %v2156, %v2287
    %v2925 = vmul.f32 %v2157, %v2292
    %v2926 = vmul.f32 %v2158, %v2297
    %v2927 = vmul.f32 %v2159, %v2302
    %v2928 = vmul.f32 %v2160, %v2307
    %v2929 = vmul.f32 %v2161, %v2312
    %v2930 = vmul.f32 %v2162, %v2317
    %v2931 = vmul.f32 %v2163, %v2322
    %v2932 = vmul.f32 %v2164, %v2327
    %v2933 = vmul.f32 %v2165, %v2332
    %v2934 = vmul.f32 %v2166, %v2337
    %v2935 = vmul.f32 %v2167, %v2342
    %v2936 = vmul.f32 %v2168, %v2347
    %v2937 = vmul.f32 %v2169, %v2352
    %v2938 = vmul.f32 %v2170, %v2357
    %v2939 = vmul.f32 %v2171, %v2362
    %v2940 = vmul.f32 %v2172, %v2367
    %v2941 = vmul.f32 %v2173, %v2372
    %v2942 = vmul.f32 %v2174, %v2377
    %v2943 = vmul.f32 %v2175, %v2382
    %v2944 = vmul.f32 %v2176, %v2387
    %v2945 = vmul.f32 %v2177, %v2392
    %v2946 = vmul.f32 %v2178, %v2397
    %v2947 = vmul.f32 %v2179, %v2402
    %v2948 = vmul.f32 %v2180, %v2407
    %v2949 = vmul.f32 %v2181, %v2412
    %v2950 = vmul.f32 %v2182, %v2417
    %v2951 = vmul.f32 %v2183, %v2422
    %v2952 = vmul.f32 %v2184, %v2427
    %v2953 = vmul.f32 %v2185, %v2432
    %v2954 = vmul.f32 %v2186, %v2437
    %v2955 = vmul.f32 %v2187, %v2442
    %v2956 = vmul.f32 %v2188, %v2447
    %v2957 = vmul.f32 %v2189, %v2452
    %v2958 = vmul.f32 %v2190, %v2457
    %v2959 = vmul.f32 %v2191, %v2462
    %v2960 = vmul.f32 %v2192, %v2467
    %v2961 = vmul.f32 %v2193, %v2472
    %v2962 = vmul.f32 %v2194, %v2477
    %v2963 = vmul.f32 %v2195, %v2482
    %v2964 = vmul.f32 %v2196, %v2487
    %v2965 = vmul.f32 %v2197, %v2492
    %v2966 = vmul.f32 %v2198, %v2497
    %v2967 = vmul.f32 %v2199, %v2502
    %v2968 = vmul.f32 %v2200, %v2507
    %v2969 = vmul.f32 %v2201, %v2512
    %v2970 = vmul.f32 %v2202, %v2517
    %v2971 = vmul.f32 %v2203, %v2522
    %v2972 = vmul.f32 %v2204, %v2527
    %v2973 = vmul.f32 %v2205, %v2532
    %v2974 = vmul.f32 %v2206, %v2537
    %v2975 = vmul.f32 %v2207, %v2542
    %v2976 = vmul.f32 %v2208, %v2547
    %v2977 = vmul.f32 %v2209, %v2552
    %v2978 = vmul.f32 %v2210, %v2557
    %v2979 = vmul.f32 %v2211, %v2562
    %v2980 = vmul.f32 %v2212, %v2567
    %v2981 = vmul.f32 %v2213, %v2572
    %v2982 = vmul.f32 %v2214, %v2577
    %v2983 = vmul.f32 %v2215, %v2582
    %v2984 = vmul.f32 %v2216, %v2587
    %v2985 = vmul.f32 %v2217, %v2592
    %v2986 = vmul.f32 %v2218, %v2597
    %v2987 = vmul.f32 %v2219, %v2602
    %v2988 = vmul.f32 %v2220, %v2607
    %v2989 = vmul.f32 %v2221, %v2612
    %v2990 = vmul.f32 %v2222, %v2617
    %v2991 = vmul.f32 %v2223, %v2622
    %v2992 = vmul.f32 %v2224, %v2627
    %v2993 = vmul.f32 %v2225, %v2632
    %v2994 = vmul.f32 %v2226, %v2637
    %v2995 = vmul.f32 %v2227, %v2642
    %v2996 = vmul.f32 %v2228, %v2647
    %v2997 = vmul.f32 %v2229, %v2652
    %v2998 = vmul.f32 %v2230, %v2657
    %v2999 = vmul.f32 %v2231, %v2662
    %v3000 = vmul.f32 %v2232, %v2667
    %v3001 = vmul.f32 %v2233, %v2672
    %v3002 = vmul.f32 %v2234, %v2677
    %v3003 = vmul.f32 %v2235, %v2682
    %v3004 = vmul.f32 %v2236, %v2687
    %v3005 = vmul.f32 %v2237, %v2692
    %v3006 = vmul.f32 %v2238, %v2697
    %v3007 = vmul.f32 %v2239, %v2702
    %v3008 = vmul.f32 %v2240, %v2707
    %v3009 = vmul.f32 %v2241, %v2712
    %v3010 = vmul.f32 %v2242, %v2717
    %v3011 = vmul.f32 %v2243, %v2722
    %v3012 = vmul.f32 %v2244, %v2727
    %v3013 = vmul.f32 %v2245, %v2732
    %v3014 = vmul.f32 %v2246, %v2737
    %v3015 = vmul.f32 %v2247, %v2742
    %v3016 = vmul.f32 %v2248, %v2747
    %v3017 = vmul.f32 %v2249, %v2752
    %v3018 = vmul.f32 %v2250, %v2757
    %v3019 = vmul.f32 %v2251, %v2762
    %v3020 = vmul.f32 %v2252, %v2767
    %v3021 = vmul.f32 %v2253, %v2772
    %v3022 = vmul.f32 %v2254, %v2777
    %v3023 = vmul.f32 %v2255, %v2782
    %v3024 = vmul.f32 %v2256, %v2787
    %v3025 = vmul.f32 %v2257, %v2792
    %v3026 = vmul.f32 %v2258, %v2797
    %v3027 = vmul.f32 %v2259, %v2802
    %v3028 = vmul.f32 %v2260, %v2807
    %v3029 = vmul.f32 %v2261, %v2812
    %v3030 = vmul.f32 %v2262, %v2817
    %v3031 = vmul.f32 %v2263, %v2822
    %v3032 = vmul.f32 %v2264, %v2827
    %v3033 = vmul.f32 %v2265, %v2832
    %v3034 = vmul.f32 %v2266, %v2837
    %v3035 = vmul.f32 %v2267, %v2842
    %v3036 = vmul.f32 %v2268, %v2847
    %v3037 = vmul.f32 %v2269, %v2852
    %v3038 = vmul.f32 %v2270, %v2857
    %v3039 = vmul.f32 %v2271, %v2862
    %v3040 = vmul.f32 %v2272, %v2867
    %v3041 = vmul.f32 %v2273, %v2872
    %v3042 = vmul.f32 %v2274, %v2877
    %v3043 = vmul.f32 %v2275, %v2882
    %v3044 = vmul.f32 %v2276, %v2887
    %v3045 = vmul.f32 %v2277, %v2892
    %v3046 = vmul.f32 %v2278, %v2897
    %v3047 = vmul.f32 %v2279, %v2902
    %v3048 = vmul.f32 %v2280, %v2907
    %v3049 = vmul.f32 %v2281, %v2912
    %v3050 = vmul.f32 %v2282, %v2917
    %v3051 = vmul.f32 %v2283, %v2922
    %v3052 = vmax.f32 %v2924, %v2925
    %v3053 = vmax.f32 %v3052, %v2926
    %v3054 = vmax.f32 %v3053, %v2927
    %v3055 = vmax.f32 %v3054, %v2928
    %v3056 = vmax.f32 %v3055, %v2929
    %v3057 = vmax.f32 %v3056, %v2930
    %v3058 = vmax.f32 %v3057, %v2931
    %v3059 = vrot.slane %v3058, 4
    %v3060 = vmax.f32 %v3058, %v3059
    %v3061 = vrot.slane %v3060, 2
    %v3062 = vmax.f32 %v3060, %v3061
    %v3063 = vrot.slane %v3062, 1
    %v3064 = vmax.f32 %v3062, %v3063
    %v3065 = vmax.f32 %v2932, %v2933
    %v3066 = vmax.f32 %v3065, %v2934
    %v3067 = vmax.f32 %v3066, %v2935
    %v3068 = vmax.f32 %v3067, %v2936
    %v3069 = vmax.f32 %v3068, %v2937
    %v3070 = vmax.f32 %v3069, %v2938
    %v3071 = vmax.f32 %v3070, %v2939
    %v3072 = vrot.slane %v3071, 4
    %v3073 = vmax.f32 %v3071, %v3072
    %v3074 = vrot.slane %v3073, 2
    %v3075 = vmax.f32 %v3073, %v3074
    %v3076 = vrot.slane %v3075, 1
    %v3077 = vmax.f32 %v3075, %v3076
    %v3078 = vmax.f32 %v2940, %v2941
    %v3079 = vmax.f32 %v3078, %v2942
    %v3080 = vmax.f32 %v3079, %v2943
    %v3081 = vmax.f32 %v3080, %v2944
    %v3082 = vmax.f32 %v3081, %v2945
    %v3083 = vmax.f32 %v3082, %v2946
    %v3084 = vmax.f32 %v3083, %v2947
    %v3085 = vrot.slane %v3084, 4
    %v3086 = vmax.f32 %v3084, %v3085
    %v3087 = vrot.slane %v3086, 2
    %v3088 = vmax.f32 %v3086, %v3087
    %v3089 = vrot.slane %v3088, 1
    %v3090 = vmax.f32 %v3088, %v3089
    %v3091 = vmax.f32 %v2948, %v2949
    %v3092 = vmax.f32 %v3091, %v2950
    %v3093 = vmax.f32 %v3092, %v2951
    %v3094 = vmax.f32 %v3093, %v2952
    %v3095 = vmax.f32 %v3094, %v2953
    %v3096 = vmax.f32 %v3095, %v2954
    %v3097 = vmax.f32 %v3096, %v2955
    %v3098 = vrot.slane %v3097, 4
    %v3099 = vmax.f32 %v3097, %v3098
    %v3100 = vrot.slane %v3099, 2
    %v3101 = vmax.f32 %v3099, %v3100
    %v3102 = vrot.slane %v3101, 1
    %v3103 = vmax.f32 %v3101, %v3102
    %v3104 = vmax.f32 %v2956, %v2957
    %v3105 = vmax.f32 %v3104, %v2958
    %v3106 = vmax.f32 %v3105, %v2959
    %v3107 = vmax.f32 %v3106, %v2960
    %v3108 = vmax.f32 %v3107, %v2961
    %v3109 = vmax.f32 %v3108, %v2962
    %v3110 = vmax.f32 %v3109, %v2963
    %v3111 = vrot.slane %v3110, 4
    %v3112 = vmax.f32 %v3110, %v3111
    %v3113 = vrot.slane %v3112, 2
    %v3114 = vmax.f32 %v3112, %v3113
    %v3115 = vrot.slane %v3114, 1
    %v3116 = vmax.f32 %v3114, %v3115
    %v3117 = vmax.f32 %v2964, %v2965
    %v3118 = vmax.f32 %v3117, %v2966
    %v3119 = vmax.f32 %v3118, %v2967
    %v3120 = vmax.f32 %v3119, %v2968
    %v3121 = vmax.f32 %v3120, %v2969
    %v3122 = vmax.f32 %v3121, %v2970
    %v3123 = vmax.f32 %v3122, %v2971
    %v3124 = vrot.slane %v3123, 4
    %v3125 = vmax.f32 %v3123, %v3124
    %v3126 = vrot.slane %v3125, 2
    %v3127 = vmax.f32 %v3125, %v3126
    %v3128 = vrot.slane %v3127, 1
    %v3129 = vmax.f32 %v3127, %v3128
    %v3130 = vmax.f32 %v2972, %v2973
    %v3131 = vmax.f32 %v3130, %v2974
    %v3132 = vmax.f32 %v3131, %v2975
    %v3133 = vmax.f32 %v3132, %v2976
    %v3134 = vmax.f32 %v3133, %v2977
    %v3135 = vmax.f32 %v3134, %v2978
    %v3136 = vmax.f32 %v3135, %v2979
    %v3137 = vrot.slane %v3136, 4
    %v3138 = vmax.f32 %v3136, %v3137
    %v3139 = vrot.slane %v3138, 2
    %v3140 = vmax.f32 %v3138, %v3139
    %v3141 = vrot.slane %v3140, 1
    %v3142 = vmax.f32 %v3140, %v3141
    %v3143 = vmax.f32 %v2980, %v2981
    %v3144 = vmax.f32 %v3143, %v2982
    %v3145 = vmax.f32 %v3144, %v2983
    %v3146 = vmax.f32 %v3145, %v2984
    %v3147 = vmax.f32 %v3146, %v2985
    %v3148 = vmax.f32 %v3147, %v2986
    %v3149 = vmax.f32 %v3148, %v2987
    %v3150 = vrot.slane %v3149, 4
    %v3151 = vmax.f32 %v3149, %v3150
    %v3152 = vrot.slane %v3151, 2
    %v3153 = vmax.f32 %v3151, %v3152
    %v3154 = vrot.slane %v3153, 1
    %v3155 = vmax.f32 %v3153, %v3154
    %v3156 = vmax.f32 %v2988, %v2989
    %v3157 = vmax.f32 %v3156, %v2990
    %v3158 = vmax.f32 %v3157, %v2991
    %v3159 = vmax.f32 %v3158, %v2992
    %v3160 = vmax.f32 %v3159, %v2993
    %v3161 = vmax.f32 %v3160, %v2994
    %v3162 = vmax.f32 %v3161, %v2995
    %v3163 = vrot.slane %v3162, 4
    %v3164 = vmax.f32 %v3162, %v3163
    %v3165 = vrot.slane %v3164, 2
    %v3166 = vmax.f32 %v3164, %v3165
    %v3167 = vrot.slane %v3166, 1
    %v3168 = vmax.f32 %v3166, %v3167
    %v3169 = vmax.f32 %v2996, %v2997
    %v3170 = vmax.f32 %v3169, %v2998
    %v3171 = vmax.f32 %v3170, %v2999
    %v3172 = vmax.f32 %v3171, %v3000
    %v3173 = vmax.f32 %v3172, %v3001
    %v3174 = vmax.f32 %v3173, %v3002
    %v3175 = vmax.f32 %v3174, %v3003
    %v3176 = vrot.slane %v3175, 4
    %v3177 = vmax.f32 %v3175, %v3176
    %v3178 = vrot.slane %v3177, 2
    %v3179 = vmax.f32 %v3177, %v3178
    %v3180 = vrot.slane %v3179, 1
    %v3181 = vmax.f32 %v3179, %v3180
    %v3182 = vmax.f32 %v3004, %v3005
    %v3183 = vmax.f32 %v3182, %v3006
    %v3184 = vmax.f32 %v3183, %v3007
    %v3185 = vmax.f32 %v3184, %v3008
    %v3186 = vmax.f32 %v3185, %v3009
    %v3187 = vmax.f32 %v3186, %v3010
    %v3188 = vmax.f32 %v3187, %v3011
    %v3189 = vrot.slane %v3188, 4
    %v3190 = vmax.f32 %v3188, %v3189
    %v3191 = vrot.slane %v3190, 2
    %v3192 = vmax.f32 %v3190, %v3191
    %v3193 = vrot.slane %v3192, 1
    %v3194 = vmax.f32 %v3192, %v3193
    %v3195 = vmax.f32 %v3012, %v3013
    %v3196 = vmax.f32 %v3195, %v3014
    %v3197 = vmax.f32 %v3196, %v3015
    %v3198 = vmax.f32 %v3197, %v3016
    %v3199 = vmax.f32 %v3198, %v3017
    %v3200 = vmax.f32 %v3199, %v3018
    %v3201 = vmax.f32 %v3200, %v3019
    %v3202 = vrot.slane %v3201, 4
    %v3203 = vmax.f32 %v3201, %v3202
    %v3204 = vrot.slane %v3203, 2
    %v3205 = vmax.f32 %v3203, %v3204
    %v3206 = vrot.slane %v3205, 1
    %v3207 = vmax.f32 %v3205, %v3206
    %v3208 = vmax.f32 %v3020, %v3021
    %v3209 = vmax.f32 %v3208, %v3022
    %v3210 = vmax.f32 %v3209, %v3023
    %v3211 = vmax.f32 %v3210, %v3024
    %v3212 = vmax.f32 %v3211, %v3025
    %v3213 = vmax.f32 %v3212, %v3026
    %v3214 = vmax.f32 %v3213, %v3027
    %v3215 = vrot.slane %v3214, 4
    %v3216 = vmax.f32 %v3214, %v3215
    %v3217 = vrot.slane %v3216, 2
    %v3218 = vmax.f32 %v3216, %v3217
    %v3219 = vrot.slane %v3218, 1
    %v3220 = vmax.f32 %v3218, %v3219
    %v3221 = vmax.f32 %v3028, %v3029
    %v3222 = vmax.f32 %v3221, %v3030
    %v3223 = vmax.f32 %v3222, %v3031
    %v3224 = vmax.f32 %v3223, %v3032
    %v3225 = vmax.f32 %v3224, %v3033
    %v3226 = vmax.f32 %v3225, %v3034
    %v3227 = vmax.f32 %v3226, %v3035
    %v3228 = vrot.slane %v3227, 4
    %v3229 = vmax.f32 %v3227, %v3228
    %v3230 = vrot.slane %v3229, 2
    %v3231 = vmax.f32 %v3229, %v3230
    %v3232 = vrot.slane %v3231, 1
    %v3233 = vmax.f32 %v3231, %v3232
    %v3234 = vmax.f32 %v3036, %v3037
    %v3235 = vmax.f32 %v3234, %v3038
    %v3236 = vmax.f32 %v3235, %v3039
    %v3237 = vmax.f32 %v3236, %v3040
    %v3238 = vmax.f32 %v3237, %v3041
    %v3239 = vmax.f32 %v3238, %v3042
    %v3240 = vmax.f32 %v3239, %v3043
    %v3241 = vrot.slane %v3240, 4
    %v3242 = vmax.f32 %v3240, %v3241
    %v3243 = vrot.slane %v3242, 2
    %v3244 = vmax.f32 %v3242, %v3243
    %v3245 = vrot.slane %v3244, 1
    %v3246 = vmax.f32 %v3244, %v3245
    %v3247 = vmax.f32 %v3044, %v3045
    %v3248 = vmax.f32 %v3247, %v3046
    %v3249 = vmax.f32 %v3248, %v3047
    %v3250 = vmax.f32 %v3249, %v3048
    %v3251 = vmax.f32 %v3250, %v3049
    %v3252 = vmax.f32 %v3251, %v3050
    %v3253 = vmax.f32 %v3252, %v3051
    %v3254 = vrot.slane %v3253, 4
    %v3255 = vmax.f32 %v3253, %v3254
    %v3256 = vrot.slane %v3255, 2
    %v3257 = vmax.f32 %v3255, %v3256
    %v3258 = vrot.slane %v3257, 1
    %v3259 = vmax.f32 %v3257, %v3258
    %v3260 = vpack.c.bf16 %v3064, %v3064
    %v3261 = vpack.c.bf16 %v3077, %v3077
    %v3262 = vpack.c.bf16 %v3090, %v3090
    %v3263 = vpack.c.bf16 %v3103, %v3103
    %v3264 = vpack.c.bf16 %v3116, %v3116
    %v3265 = vpack.c.bf16 %v3129, %v3129
    %v3266 = vpack.c.bf16 %v3142, %v3142
    %v3267 = vpack.c.bf16 %v3155, %v3155
    %v3268 = vpack.c.bf16 %v3168, %v3168
    %v3269 = vpack.c.bf16 %v3181, %v3181
    %v3270 = vpack.c.bf16 %v3194, %v3194
    %v3271 = vpack.c.bf16 %v3207, %v3207
    %v3272 = vpack.c.bf16 %v3220, %v3220
    %v3273 = vpack.c.bf16 %v3233, %v3233
    %v3274 = vpack.c.bf16 %v3246, %v3246
    %v3275 = vpack.c.bf16 %v3259, %v3259
    %v3292 = vunpack.c.l.b16 %v3260
    %v3293 = vunpack.c.l.b16 %v3261
    %v3294 = vunpack.c.l.b16 %v3262
    %v3295 = vunpack.c.l.b16 %v3263
    %v3296 = vunpack.c.l.b16 %v3264
    %v3297 = vunpack.c.l.b16 %v3265
    %v3298 = vunpack.c.l.b16 %v3266
    %v3299 = vunpack.c.l.b16 %v3267
    %v3300 = vunpack.c.l.b16 %v3268
    %v3301 = vunpack.c.l.b16 %v3269
    %v3302 = vunpack.c.l.b16 %v3270
    %v3303 = vunpack.c.l.b16 %v3271
    %v3304 = vunpack.c.l.b16 %v3272
    %v3305 = vunpack.c.l.b16 %v3273
    %v3306 = vunpack.c.l.b16 %v3274
    %v3307 = vunpack.c.l.b16 %v3275
    %v3308 = vpack.c.b16 %v3292, %v3292
    %v3309 = vpack.c.b16 %v3293, %v3293
    %v3310 = vpack.c.b16 %v3294, %v3294
    %v3311 = vpack.c.b16 %v3295, %v3295
    %v3312 = vpack.c.b16 %v3296, %v3296
    %v3313 = vpack.c.b16 %v3297, %v3297
    %v3314 = vpack.c.b16 %v3298, %v3298
    %v3315 = vpack.c.b16 %v3299, %v3299
    %v3316 = vpack.c.b16 %v3300, %v3300
    %v3317 = vpack.c.b16 %v3301, %v3301
    %v3318 = vpack.c.b16 %v3302, %v3302
    %v3319 = vpack.c.b16 %v3303, %v3303
    %v3320 = vpack.c.b16 %v3304, %v3304
    %v3321 = vpack.c.b16 %v3305, %v3305
    %v3322 = vpack.c.b16 %v3306, %v3306
    %v3323 = vpack.c.b16 %v3307, %v3307
    %v3324 = vunpack.c.l.b16 %v3308
    %v3325 = vunpack.c.l.b16 %v3309
    %v3326 = vunpack.c.l.b16 %v3310
    %v3327 = vunpack.c.l.b16 %v3311
    %v3328 = vunpack.c.l.b16 %v3312
    %v3329 = vunpack.c.l.b16 %v3313
    %v3330 = vunpack.c.l.b16 %v3314
    %v3331 = vunpack.c.l.b16 %v3315
    %v3332 = vunpack.c.l.b16 %v3316
    %v3333 = vunpack.c.l.b16 %v3317
    %v3334 = vunpack.c.l.b16 %v3318
    %v3335 = vunpack.c.l.b16 %v3319
    %v3336 = vunpack.c.l.b16 %v3320
    %v3337 = vunpack.c.l.b16 %v3321
    %v3338 = vunpack.c.l.b16 %v3322
    %v3339 = vunpack.c.l.b16 %v3323
    %vm3340 = vcmask 1041409
    %v3341 = vsel %vm3340, %v3325, %v3324
    %vm3342 = vcmask 1042434
    %v3343 = vsel %vm3342, %v3326, %v3341
    %vm3344 = vcmask 1043459
    %v3345 = vsel %vm3344, %v3327, %v3343
    %vm3346 = vcmask 1044484
    %v3347 = vsel %vm3346, %v3328, %v3345
    %vm3348 = vcmask 1045509
    %v3349 = vsel %vm3348, %v3329, %v3347
    %vm3350 = vcmask 1046534
    %v3351 = vsel %vm3350, %v3330, %v3349
    %vm3352 = vcmask 1047559
    %v3353 = vsel %vm3352, %v3331, %v3351
    %v3354 = vsel %vm3340, %v3333, %v3332
    %v3355 = vsel %vm3342, %v3334, %v3354
    %v3356 = vsel %vm3344, %v3335, %v3355
    %v3357 = vsel %vm3346, %v3336, %v3356
    %v3358 = vsel %vm3348, %v3337, %v3357
    %v3359 = vsel %vm3350, %v3338, %v3358
    %v3360 = vsel %vm3352, %v3339, %v3359
    %v3361 = vpack.c.b16 %v3353, %v3353
    %v3362 = vpack.c.b16 %v3360, %v3360
    %3365 = vst [vmem:[#allocation2] sm:$0xf] %v3361
    %3366 = vst [vmem:[#allocation2 + $0x4] sm:$0xf] %v3362
    // Predicated region
    $region22: #{tpu_custom_call.1} parent=1 // pred_check
      _
    $region23: #{tpu_custom_call.1} parent=1 // pred_check_branch
      %3368 = sbr.rel (0) target = $region25
    $region24: #{tpu_custom_call.1} parent=1 // pred_region
      %s3370 = ssub.s32 128, 128
      %3371 = vsyncadd [#allocation3], %s3370
      %s3372 = sshll.u32 [#allocation2], 4
      %s3373 = int_to_ptr.vmem [resolvable:$true] %s3372
      %3378 = dma.vmem_to_hbm [thread:$0]  %s3373, 128, %s5, [#allocation3], 64, 64, 4
    $region25: #{tpu_custom_call.1} parent=1 // pred_fallthru
      _
    // Predicated region
    $region26: #{tpu_custom_call.1} parent=1 // pred_check
      _
    $region27: #{tpu_custom_call.1} parent=1 // pred_check_branch
      %3380 = sbr.rel (0) target = $region29
    $region28: #{tpu_custom_call.1} parent=1 // pred_region
      %3381 = dma.done [#allocation3], 128
    $region29: #{tpu_custom_call.1} parent=1 // pred_fallthru
      _
    %3382 = vsyncpa [#allocation3], 1

</llo_original>
